<compile_context>
chip_gen: v7x
topology: tpu7x:2x2x1
jax: 0.10.0
libtpu: 0.0.40
codegen_flags: <defaults>
</compile_context>

<pallas_src>
import jax
import jax.numpy as jnp
from jax.experimental import pallas as pl
from jax.experimental.pallas import tpu as pltpu


def _round_up(x, m):
    return (x + m - 1) // m * m


def beta_vae_kernel(x_ref, eps_ref,
                    w1_ref, b1_ref,
                    wml_ref, bml_ref,
                    w3_ref, b3_ref,
                    w4_ref, b4_ref,
                    recon_ref, mulv_ref):
    latent = eps_ref.shape[-1]

    # ---- encoder: h = relu(x @ W1 + b1)  (bf16 MXU operands, f32 accumulate) ----
    x = x_ref[...].astype(jnp.bfloat16)                       # (TB, D)
    h = jnp.dot(x, w1_ref[...], preferred_element_type=jnp.float32) + b1_ref[...]
    h = jnp.maximum(h, 0.0)                                   # f32 ReLU (VPU)

    # ---- fused mu|logvar projection: one lane-dense (hidden, 128) matmul ----
    mulv = jnp.dot(h.astype(jnp.bfloat16), wml_ref[...],
                   preferred_element_type=jnp.float32) + bml_ref[...]
    mu = mulv[:, :latent]
    logvar = mulv[:, latent:2 * latent]

    # ---- reparametrize: z = eps * exp(0.5 * logvar) + mu  (f32, exp on EUP) ----
    std = jnp.exp(0.5 * logvar)
    z = eps_ref[...] * std + mu

    # ---- decoder ----
    h2 = jnp.dot(z.astype(jnp.bfloat16), w3_ref[...],
                 preferred_element_type=jnp.float32) + b3_ref[...]
    h2 = jnp.maximum(h2, 0.0)
    logits = jnp.dot(h2.astype(jnp.bfloat16), w4_ref[...],
                     preferred_element_type=jnp.float32) + b4_ref[...]

    recon_ref[...] = jax.nn.sigmoid(logits)                   # f32 sigmoid (EUP)
    mulv_ref[...] = mulv                                      # lane-dense store


def beta_vae_forward(x_nchw, eps, params, *, tile_b=128):
    """x_nchw: (B, C, H, W) float32. Returns (recon, mu, logvar).
    recon has shape (B, C*H*W); mu/logvar have shape (B, latent)."""
    B = x_nchw.shape[0]
    x_flat = x_nchw.reshape(B, -1)                            # matches x.view(B, -1)
    D = x_flat.shape[1]
    latent = eps.shape[1]
    hidden = params["w1"].shape[1]
    lat_pad = params["wml"].shape[1]                          # fused width, mult. of 128

    # batch tile: at least 8 rows (f32 sublane), no larger than the padded batch.
    tile_b = max(8, min(tile_b, _round_up(B, 8)))
    b_pad = _round_up(B, tile_b)
    if b_pad != B:
        x_flat = jnp.pad(x_flat, ((0, b_pad - B), (0, 0)))
        eps = jnp.pad(eps, ((0, b_pad - B), (0, 0)))

    grid = (b_pad // tile_b,)

    def act_spec(width):
        return pl.BlockSpec((tile_b, width), lambda i: (i, 0))

    def const_spec(arr):
        return pl.BlockSpec(arr.shape, lambda i: (0, 0))      # weights stay resident

    in_specs = [
        act_spec(D),                                          # x
        act_spec(latent),                                     # eps
        const_spec(params["w1"]), const_spec(params["b1"]),
        const_spec(params["wml"]), const_spec(params["bml"]),
        const_spec(params["w3"]), const_spec(params["b3"]),
        const_spec(params["w4"]), const_spec(params["b4"]),
    ]
    out_specs = (
        act_spec(D),                                          # recon
        act_spec(lat_pad),                                    # fused mu|logvar
    )
    out_shapes = (
        jax.ShapeDtypeStruct((b_pad, D), jnp.float32),
        jax.ShapeDtypeStruct((b_pad, lat_pad), jnp.float32),
    )

    weight_bytes = sum(int(params[k].size) * params[k].dtype.itemsize
                       for k in ("w1", "b1", "wml", "bml", "w3", "b3", "w4", "b4"))
    cost = pl.CostEstimate(
        flops=2 * b_pad * (D * hidden + hidden * lat_pad + latent * hidden + hidden * D),
        transcendentals=b_pad * (latent + D),
        bytes_accessed=4 * b_pad * (2 * D + latent + lat_pad) + weight_bytes,
    )

    recon_full, mulv_full = pl.pallas_call(
        beta_vae_kernel,
        grid=grid,
        in_specs=in_specs,
        out_specs=out_specs,
        out_shape=out_shapes,
        compiler_params=pltpu.CompilerParams(
            dimension_semantics=("parallel",),                # megacore on v7x
            vmem_limit_bytes=32 << 20,                        # well under 64 MiB v7x VMEM
        ),
        cost_estimate=cost,
    )(
        x_flat, eps,
        params["w1"], params["b1"],
        params["wml"], params["bml"],
        params["w3"], params["b3"],
        params["w4"], params["b4"],
    )

    recon = recon_full[:B]
    mu = mulv_full[:B, :latent]
    logvar = mulv_full[:B, latent:2 * latent]
    return recon, mu, logvar


def init_params(key, in_dim, hidden, latent):
    ks = jax.random.split(key, 5)

    def glorot(k, fan_in, fan_out):
        scale = jnp.sqrt(2.0 / (fan_in + fan_out))
        return (scale * jax.random.normal(k, (fan_in, fan_out))).astype(jnp.float32)

    w1 = glorot(ks[0], in_dim, hidden)
    wmu = glorot(ks[1], hidden, latent)
    wlv = glorot(ks[2], hidden, latent)
    w3 = glorot(ks[3], latent, hidden)
    w4 = glorot(ks[4], hidden, in_dim)

    # Fuse mu|logvar projection and zero-pad to a 128-lane multiple for a
    # lane-dense output store (padded lanes carry zeros and are sliced off).
    lat_pad = max(128, _round_up(2 * latent, 128))
    wml = jnp.zeros((hidden, lat_pad), jnp.float32).at[:, :2 * latent].set(
        jnp.concatenate([wmu, wlv], axis=1))
    bml = jnp.zeros((1, lat_pad), jnp.float32)

    # MXU operands stored as bf16 (halves HBM weight traffic); biases stay f32
    # so all elementwise adds / activations run in f32.
    return {
        "w1":  w1.astype(jnp.bfloat16),
        "b1":  jnp.zeros((1, hidden), jnp.float32),
        "wml": wml.astype(jnp.bfloat16),
        "bml": bml,
        "w3":  w3.astype(jnp.bfloat16),
        "b3":  jnp.zeros((1, hidden), jnp.float32),
        "w4":  w4.astype(jnp.bfloat16),
        "b4":  jnp.zeros((1, in_dim), jnp.float32),
    }


if __name__ == "__main__":
    B, C, H, W = 2, 4, 16, 16
    hidden, latent = 128, 32
    in_dim = C * H * W

    root = jax.random.PRNGKey(0)
    k_x, k_eps, k_p = jax.random.split(root, 3)

    x = jax.random.uniform(k_x, (B, C, H, W), dtype=jnp.float32)
    eps = jax.random.normal(k_eps, (B, latent), dtype=jnp.float32)
    params = init_params(k_p, in_dim, hidden, latent)

    recon, mu, logvar = beta_vae_forward(x, eps, params)
    jax.block_until_ready((recon, mu, logvar))

    # ---- shape / range sanity ----
    assert recon.shape == (B, in_dim)
    assert mu.shape == (B, latent) and logvar.shape == (B, latent)
    assert bool(jnp.all(jnp.isfinite(recon)))
    assert bool(jnp.all(recon >= 0.0)) and bool(jnp.all(recon <= 1.0))
    assert bool(jnp.all(jnp.isfinite(mu))) and bool(jnp.all(jnp.isfinite(logvar)))

    # ---- pure-JAX reference (same bf16 weights, f32 accumulation) ----
    xf = x.reshape(B, -1)
    h_r = jnp.maximum(jnp.dot(xf.astype(jnp.bfloat16), params["w1"],
                              preferred_element_type=jnp.float32) + params["b1"], 0.0)
    mulv_r = jnp.dot(h_r.astype(jnp.bfloat16), params["wml"],
                     preferred_element_type=jnp.float32) + params["bml"]
    mu_r = mulv_r[:, :latent]
    lv_r = mulv_r[:, latent:2 * latent]
    z_r = eps * jnp.exp(0.5 * lv_r) + mu_r
    h2_r = jnp.maximum(jnp.dot(z_r.astype(jnp.bfloat16), params["w3"],
                               preferred_element_type=jnp.float32) + params["b3"], 0.0)
    recon_r = jax.nn.sigmoid(jnp.dot(h2_r.astype(jnp.bfloat16), params["w4"],
                                     preferred_element_type=jnp.float32) + params["b4"])
    assert bool(jnp.allclose(mu, mu_r, atol=1e-4, rtol=1e-4))
    assert bool(jnp.allclose(logvar, lv_r, atol=1e-4, rtol=1e-4))
    assert bool(jnp.allclose(recon, recon_r, atol=1e-4, rtol=1e-4))

    print("KERNEL_OK")
</pallas_src>

<mosaic_0001>
module attributes {stable_mosaic.version = 11 : i64} {
  func.func @beta_vae_kernel(%arg0: i32, %arg1: memref<8x1024xf32, #tpu.memory_space<vmem>>, %arg2: memref<8x32xf32, #tpu.memory_space<vmem>>, %arg3: memref<1024x128xbf16, #tpu.memory_space<vmem>>, %arg4: memref<1x128xf32, #tpu.memory_space<vmem>>, %arg5: memref<128x128xbf16, #tpu.memory_space<vmem>>, %arg6: memref<1x128xf32, #tpu.memory_space<vmem>>, %arg7: memref<32x128xbf16, #tpu.memory_space<vmem>>, %arg8: memref<1x128xf32, #tpu.memory_space<vmem>>, %arg9: memref<128x1024xbf16, #tpu.memory_space<vmem>>, %arg10: memref<1x1024xf32, #tpu.memory_space<vmem>>, %arg11: memref<8x1024xf32, #tpu.memory_space<vmem>>, %arg12: memref<8x128xf32, #tpu.memory_space<vmem>>) attributes {dimension_semantics = [#tpu.dimension_semantics<parallel>], iteration_bounds = array<i64: 1>, scalar_prefetch = 0 : i64, scratch_operands = 0 : i64, tpu.core_type = #tpu.core_type<tc>, window_params = [{transform_indices = @transform_0, window_bounds = array<i64: 8, 1024>}, {transform_indices = @transform_1, window_bounds = array<i64: 8, 32>}, {pipeline_mode = #tpu.pipeline_mode<synchronous>, transform_indices = @transform_2, window_bounds = array<i64: 1024, 128>}, {pipeline_mode = #tpu.pipeline_mode<synchronous>, transform_indices = @transform_3, window_bounds = array<i64: 1, 128>}, {pipeline_mode = #tpu.pipeline_mode<synchronous>, transform_indices = @transform_4, window_bounds = array<i64: 128, 128>}, {pipeline_mode = #tpu.pipeline_mode<synchronous>, transform_indices = @transform_5, window_bounds = array<i64: 1, 128>}, {pipeline_mode = #tpu.pipeline_mode<synchronous>, transform_indices = @transform_6, window_bounds = array<i64: 32, 128>}, {pipeline_mode = #tpu.pipeline_mode<synchronous>, transform_indices = @transform_7, window_bounds = array<i64: 1, 128>}, {pipeline_mode = #tpu.pipeline_mode<synchronous>, transform_indices = @transform_8, window_bounds = array<i64: 128, 1024>}, {pipeline_mode = #tpu.pipeline_mode<synchronous>, transform_indices = @transform_9, window_bounds = array<i64: 1, 1024>}, {transform_indices = @transform_10, window_bounds = array<i64: 8, 1024>}, {transform_indices = @transform_11, window_bounds = array<i64: 8, 128>}]} {
    %c0 = arith.constant 0 : index
    %c0_0 = arith.constant 0 : index
    %0 = vector.load %arg1[%c0, %c0_0] : memref<8x1024xf32, #tpu.memory_space<vmem>>, vector<8x1024xf32>
    %1 = arith.truncf %0 : vector<8x1024xf32> to vector<8x1024xbf16>
    %c0_1 = arith.constant 0 : index
    %c0_2 = arith.constant 0 : index
    %2 = vector.load %arg3[%c0_1, %c0_2] : memref<1024x128xbf16, #tpu.memory_space<vmem>>, vector<1024x128xbf16>
    %cst = arith.constant dense<0.000000e+00> : vector<8x128xf32>
    %3 = tpu.matmul %1, %2, %cst {dimension_numbers = #tpu.dot_dimension_numbers<[1], [0], [0], [1], [0, 0, 1, 1], [], []>} : vector<8x1024xbf16>, vector<1024x128xbf16>, vector<8x128xf32> -> vector<8x128xf32>
    %c0_3 = arith.constant 0 : index
    %c0_4 = arith.constant 0 : index
    %4 = vector.load %arg4[%c0_3, %c0_4] : memref<1x128xf32, #tpu.memory_space<vmem>>, vector<1x128xf32>
    %5 = vector.broadcast %4 : vector<1x128xf32> to vector<8x128xf32>
    %6 = arith.addf %3, %5 : vector<8x128xf32>
    %cst_5 = arith.constant 0.000000e+00 : f32
    %7 = vector.broadcast %cst_5 : f32 to vector<8x128xf32>
    %8 = arith.maximumf %6, %7 : vector<8x128xf32>
    %9 = arith.truncf %8 : vector<8x128xf32> to vector<8x128xbf16>
    %c0_6 = arith.constant 0 : index
    %c0_7 = arith.constant 0 : index
    %10 = vector.load %arg5[%c0_6, %c0_7] : memref<128x128xbf16, #tpu.memory_space<vmem>>, vector<128x128xbf16>
    %cst_8 = arith.constant dense<0.000000e+00> : vector<8x128xf32>
    %11 = tpu.matmul %9, %10, %cst_8 {dimension_numbers = #tpu.dot_dimension_numbers<[1], [0], [0], [1], [0, 0, 1, 1], [], []>} : vector<8x128xbf16>, vector<128x128xbf16>, vector<8x128xf32> -> vector<8x128xf32>
    %c0_9 = arith.constant 0 : index
    %c0_10 = arith.constant 0 : index
    %12 = vector.load %arg6[%c0_9, %c0_10] : memref<1x128xf32, #tpu.memory_space<vmem>>, vector<1x128xf32>
    %13 = vector.broadcast %12 : vector<1x128xf32> to vector<8x128xf32>
    %14 = arith.addf %11, %13 : vector<8x128xf32>
    %15 = vector.extract_strided_slice %14 {offsets = [0, 0], sizes = [8, 32], strides = [1, 1]} : vector<8x128xf32> to vector<8x32xf32>
    %16 = vector.extract_strided_slice %14 {offsets = [0, 32], sizes = [8, 32], strides = [1, 1]} : vector<8x128xf32> to vector<8x32xf32>
    %cst_11 = arith.constant 5.000000e-01 : f32
    %17 = vector.broadcast %cst_11 : f32 to vector<8x32xf32>
    %18 = arith.mulf %17, %16 : vector<8x32xf32>
    %19 = math.exp %18 : vector<8x32xf32>
    %c0_12 = arith.constant 0 : index
    %c0_13 = arith.constant 0 : index
    %20 = vector.load %arg2[%c0_12, %c0_13] : memref<8x32xf32, #tpu.memory_space<vmem>>, vector<8x32xf32>
    %21 = arith.mulf %20, %19 : vector<8x32xf32>
    %22 = arith.addf %21, %15 : vector<8x32xf32>
    %23 = arith.truncf %22 : vector<8x32xf32> to vector<8x32xbf16>
    %c0_14 = arith.constant 0 : index
    %c0_15 = arith.constant 0 : index
    %24 = vector.load %arg7[%c0_14, %c0_15] : memref<32x128xbf16, #tpu.memory_space<vmem>>, vector<32x128xbf16>
    %cst_16 = arith.constant dense<0.000000e+00> : vector<8x128xf32>
    %25 = tpu.matmul %23, %24, %cst_16 {dimension_numbers = #tpu.dot_dimension_numbers<[1], [0], [0], [1], [0, 0, 1, 1], [], []>} : vector<8x32xbf16>, vector<32x128xbf16>, vector<8x128xf32> -> vector<8x128xf32>
    %c0_17 = arith.constant 0 : index
    %c0_18 = arith.constant 0 : index
    %26 = vector.load %arg8[%c0_17, %c0_18] : memref<1x128xf32, #tpu.memory_space<vmem>>, vector<1x128xf32>
    %27 = vector.broadcast %26 : vector<1x128xf32> to vector<8x128xf32>
    %28 = arith.addf %25, %27 : vector<8x128xf32>
    %cst_19 = arith.constant 0.000000e+00 : f32
    %29 = vector.broadcast %cst_19 : f32 to vector<8x128xf32>
    %30 = arith.maximumf %28, %29 : vector<8x128xf32>
    %31 = arith.truncf %30 : vector<8x128xf32> to vector<8x128xbf16>
    %c0_20 = arith.constant 0 : index
    %c0_21 = arith.constant 0 : index
    %32 = vector.load %arg9[%c0_20, %c0_21] : memref<128x1024xbf16, #tpu.memory_space<vmem>>, vector<128x1024xbf16>
    %cst_22 = arith.constant dense<0.000000e+00> : vector<8x1024xf32>
    %33 = tpu.matmul %31, %32, %cst_22 {dimension_numbers = #tpu.dot_dimension_numbers<[1], [0], [0], [1], [0, 0, 1, 1], [], []>} : vector<8x128xbf16>, vector<128x1024xbf16>, vector<8x1024xf32> -> vector<8x1024xf32>
    %c0_23 = arith.constant 0 : index
    %c0_24 = arith.constant 0 : index
    %34 = vector.load %arg10[%c0_23, %c0_24] : memref<1x1024xf32, #tpu.memory_space<vmem>>, vector<1x1024xf32>
    %35 = vector.broadcast %34 : vector<1x1024xf32> to vector<8x1024xf32>
    %36 = arith.addf %33, %35 : vector<8x1024xf32>
    %37 = arith.negf %36 : vector<8x1024xf32>
    %38 = math.exp %37 : vector<8x1024xf32>
    %cst_25 = arith.constant 1.000000e+00 : f32
    %39 = vector.broadcast %cst_25 : f32 to vector<8x1024xf32>
    %40 = arith.addf %39, %38 : vector<8x1024xf32>
    %41 = arith.divf %39, %40 : vector<8x1024xf32>
    %c0_26 = arith.constant 0 : index
    %c0_27 = arith.constant 0 : index
    %42 = vector.load %arg11[%c0_26, %c0_27] : memref<8x1024xf32, #tpu.memory_space<vmem>>, vector<8x1024xf32>
    tpu.vector_store %arg11[%c0_26, %c0_27], %41 {strides = array<i32>} : memref<8x1024xf32, #tpu.memory_space<vmem>>, vector<8x1024xf32>,
    %c0_28 = arith.constant 0 : index
    %c0_29 = arith.constant 0 : index
    %43 = vector.load %arg12[%c0_28, %c0_29] : memref<8x128xf32, #tpu.memory_space<vmem>>, vector<8x128xf32>
    tpu.vector_store %arg12[%c0_28, %c0_29], %14 {strides = array<i32>} : memref<8x128xf32, #tpu.memory_space<vmem>>, vector<8x128xf32>,
    return
  }
  func.func @transform_0(%arg0: i32) -> (i32, i32) {
    %c0_i32 = arith.constant 0 : i32
    %c0_i32_0 = arith.constant 0 : i32
    return %arg0, %c0_i32 : i32, i32
  }
  func.func @transform_1(%arg0: i32) -> (i32, i32) {
    %c0_i32 = arith.constant 0 : i32
    %c0_i32_0 = arith.constant 0 : i32
    return %arg0, %c0_i32 : i32, i32
  }
  func.func @transform_2(%arg0: i32) -> (i32, i32) {
    %c0_i32 = arith.constant 0 : i32
    %c0_i32_0 = arith.constant 0 : i32
    %c0_i32_1 = arith.constant 0 : i32
    return %c0_i32, %c0_i32_0 : i32, i32
  }
  func.func @transform_3(%arg0: i32) -> (i32, i32) {
    %c0_i32 = arith.constant 0 : i32
    %c0_i32_0 = arith.constant 0 : i32
    %c0_i32_1 = arith.constant 0 : i32
    return %c0_i32, %c0_i32_0 : i32, i32
  }
  func.func @transform_4(%arg0: i32) -> (i32, i32) {
    %c0_i32 = arith.constant 0 : i32
    %c0_i32_0 = arith.constant 0 : i32
    %c0_i32_1 = arith.constant 0 : i32
    return %c0_i32, %c0_i32_0 : i32, i32
  }
  func.func @transform_5(%arg0: i32) -> (i32, i32) {
    %c0_i32 = arith.constant 0 : i32
    %c0_i32_0 = arith.constant 0 : i32
    %c0_i32_1 = arith.constant 0 : i32
    return %c0_i32, %c0_i32_0 : i32, i32
  }
  func.func @transform_6(%arg0: i32) -> (i32, i32) {
    %c0_i32 = arith.constant 0 : i32
    %c0_i32_0 = arith.constant 0 : i32
    %c0_i32_1 = arith.constant 0 : i32
    return %c0_i32, %c0_i32_0 : i32, i32
  }
  func.func @transform_7(%arg0: i32) -> (i32, i32) {
    %c0_i32 = arith.constant 0 : i32
    %c0_i32_0 = arith.constant 0 : i32
    %c0_i32_1 = arith.constant 0 : i32
    return %c0_i32, %c0_i32_0 : i32, i32
  }
  func.func @transform_8(%arg0: i32) -> (i32, i32) {
    %c0_i32 = arith.constant 0 : i32
    %c0_i32_0 = arith.constant 0 : i32
    %c0_i32_1 = arith.constant 0 : i32
    return %c0_i32, %c0_i32_0 : i32, i32
  }
  func.func @transform_9(%arg0: i32) -> (i32, i32) {
    %c0_i32 = arith.constant 0 : i32
    %c0_i32_0 = arith.constant 0 : i32
    %c0_i32_1 = arith.constant 0 : i32
    return %c0_i32, %c0_i32_0 : i32, i32
  }
  func.func @transform_10(%arg0: i32) -> (i32, i32) {
    %c0_i32 = arith.constant 0 : i32
    %c0_i32_0 = arith.constant 0 : i32
    return %arg0, %c0_i32 : i32, i32
  }
  func.func @transform_11(%arg0: i32) -> (i32, i32) {
    %c0_i32 = arith.constant 0 : i32
    %c0_i32_0 = arith.constant 0 : i32
    return %arg0, %c0_i32 : i32, i32
  }
}

</mosaic_0001>

<llo_original>
// kernel: tpu_custom_call.1
$region0: #{tpu_custom_call.1}
  #allocation0 [shape = 'u32[]', space=smem, size = 0x4, offset = 0x4, fixed_abs, tag = 'smem constant byte address 0x4 - core index']
  #allocation1 [shape = 'u32[144,128]{1,0:T(1,128)}', space=vmem, size = 0x12000, scoped, tag = 'internal scratch']
  %s0 = inlined_call_operand.hbm [shape: f32[8,1024], index: 0, kind: input, shape index: {}]
  %s1 = inlined_call_operand.hbm [shape: f32[8,32], index: 1, kind: input, shape index: {}]
  %s2 = inlined_call_operand.hbm [shape: bf16[1024,128], index: 2, kind: input, shape index: {}]
  %s3 = inlined_call_operand.vmem [shape: f32[1,128], index: 3, kind: input, shape index: {}]
  %s4 = inlined_call_operand.hbm [shape: bf16[128,128], index: 4, kind: input, shape index: {}]
  %s5 = inlined_call_operand.vmem [shape: f32[1,128], index: 5, kind: input, shape index: {}]
  %s6 = inlined_call_operand.vmem [shape: bf16[32,128], index: 6, kind: input, shape index: {}]
  %s7 = inlined_call_operand.hbm [shape: f32[1,128], index: 7, kind: input, shape index: {}]
  %s8 = inlined_call_operand.hbm [shape: bf16[128,1024], index: 8, kind: input, shape index: {}]
  %s9 = inlined_call_operand.vmem [shape: f32[1,1024], index: 9, kind: input, shape index: {}]
  %s10 = inlined_call_operand.hbm [shape: f32[8,1024], index: 10, kind: output, shape index: {0}]
  %s11 = inlined_call_operand.hbm [shape: f32[8,128], index: 11, kind: output, shape index: {1}]
  %12 = xla_tuple %s10, %s11
  %s13 = sld [smem:[#allocation0]]
  $region82: #{tpu_custom_call.1} parent=0
    _
  %s15 = ssub.s32 1, %s13
  %s16 = scalar_select 0, %s15, %s13
  $region1: #{tpu_custom_call.1} parent=0
    #allocation2 [shape = 'u8[32768]{0}', space=vmem, size = 0x8000, scoped, tag = 'input window, operand 0, single buffered']
    #allocation3 [shape = 's32[1]{0}', space=sflag, size = 0x4, scoped, tag = 'scoped memory for tpu_custom_call.1']
    #allocation4 [shape = 's32[1]{0}', space=sflag, size = 0x4, scoped, tag = 'scoped memory for tpu_custom_call.1']
    #allocation5 [shape = 'u8[4096]{0}', space=vmem, size = 0x1000, scoped, tag = 'input window, operand 1, single buffered']
    #allocation6 [shape = 's32[1]{0}', space=sflag, size = 0x4, scoped, tag = 'scoped memory for tpu_custom_call.1']
    #allocation7 [shape = 'u8[262144]{0}', space=vmem, size = 0x40000, scoped, tag = 'input window, operand 2, single buffered']
    #allocation8 [shape = 'u8[32768]{0}', space=vmem, size = 0x8000, scoped, tag = 'input window, operand 4, single buffered']
    #allocation9 [shape = 's32[1]{0}', space=sflag, size = 0x4, scoped, tag = 'scoped memory for tpu_custom_call.1']
    #allocation10 [shape = 'u8[512]{0}', space=vmem, size = 0x400, scoped, tag = 'input window, operand 7, single buffered']
    #allocation11 [shape = 'u8[262144]{0}', space=vmem, size = 0x40000, scoped, tag = 'input window, operand 8, single buffered']
    #allocation12 [shape = 's32[1]{0}', space=sflag, size = 0x4, scoped, tag = 'scoped memory for tpu_custom_call.1']
    #allocation13 [shape = 'u8[32768]{0}', space=vmem, size = 0x8000, scoped, tag = 'output window, operand 0, single buffered']
    #allocation14 [shape = 'u8[4096]{0}', space=vmem, size = 0x1000, scoped, tag = 'output window, operand 1, single buffered']
    #allocation15 [shape = 's32[1]{0}', space=sflag, size = 0x4, scoped, tag = 'scoped memory for tpu_custom_call.1']
    %17 = vsyncpa [#allocation3], 0
    %18 = vsyncpa [#allocation6], 0
    %19 = vsyncpa [#allocation9], 0
    %20 = vsyncpa [#allocation12], 0
    %21 = vsyncpa [#allocation4], 0
    %22 = vsyncpa [#allocation15], 0
    // Predicated region
    $region2: #{tpu_custom_call.1} parent=1 // pred_check
      _
    $region3: #{tpu_custom_call.1} parent=1 // pred_check_branch
      %24 = sbr.rel (0) target = $region5
    $region4: #{tpu_custom_call.1} parent=1 // pred_region
      %s26 = ssub.s32 1024, 1024
      %27 = vsyncadd [#allocation3], %s26
      %s29 = sshll.u32 [#allocation2], 4
      %s30 = int_to_ptr.vmem [resolvable:$true] %s29
      %32 = dma.hbm_to_vmem [thread:$0]  %s0, 1024, %s30, [#allocation3]
    $region5: #{tpu_custom_call.1} parent=1 // pred_fallthru
      _
    // Predicated region
    $region6: #{tpu_custom_call.1} parent=1 // pred_check
      _
    $region7: #{tpu_custom_call.1} parent=1 // pred_check_branch
      %34 = sbr.rel (0) target = $region9
    $region8: #{tpu_custom_call.1} parent=1 // pred_region
      %s36 = ssub.s32 128, 128
      %37 = vsyncadd [#allocation6], %s36
      %s39 = sshll.u32 [#allocation5], 4
      %s40 = int_to_ptr.vmem [resolvable:$true] %s39
      %42 = dma.hbm_to_vmem [thread:$0]  %s1, 128, %s40, [#allocation6]
    $region9: #{tpu_custom_call.1} parent=1 // pred_fallthru
      _
    // Predicated region
    $region10: #{tpu_custom_call.1} parent=1 // pred_check
      _
    $region11: #{tpu_custom_call.1} parent=1 // pred_check_branch
      %44 = sbr.rel (0) target = $region13
    $region12: #{tpu_custom_call.1} parent=1 // pred_region
      %s46 = ssub.s32 8192, 8192
      %47 = vsyncadd [#allocation6], %s46
      %s48 = sshll.u32 [#allocation7], 4
      %s49 = int_to_ptr.vmem [resolvable:$true] %s48
      %54 = dma.hbm_to_vmem [thread:$0]  %s2, 8192, %s49, [#allocation6], 64, 64, 4
    $region13: #{tpu_custom_call.1} parent=1 // pred_fallthru
      _
    // Predicated region
    $region14: #{tpu_custom_call.1} parent=1 // pred_check
      _
    $region15: #{tpu_custom_call.1} parent=1 // pred_check_branch
      %56 = sbr.rel (0) target = $region17
    $region16: #{tpu_custom_call.1} parent=1 // pred_region
      _
    $region17: #{tpu_custom_call.1} parent=1 // pred_fallthru
      _
    // Predicated region
    $region18: #{tpu_custom_call.1} parent=1 // pred_check
      _
    $region19: #{tpu_custom_call.1} parent=1 // pred_check_branch
      %58 = sbr.rel (0) target = $region21
    $region20: #{tpu_custom_call.1} parent=1 // pred_region
      %s60 = ssub.s32 1024, 1024
      %61 = vsyncadd [#allocation9], %s60
      %s62 = sshll.u32 [#allocation8], 4
      %s63 = int_to_ptr.vmem [resolvable:$true] %s62
      %68 = dma.hbm_to_vmem [thread:$0]  %s4, 1024, %s63, [#allocation9], 64, 64, 4
    $region21: #{tpu_custom_call.1} parent=1 // pred_fallthru
      _
    // Predicated region
    $region22: #{tpu_custom_call.1} parent=1 // pred_check
      _
    $region23: #{tpu_custom_call.1} parent=1 // pred_check_branch
      %70 = sbr.rel (0) target = $region25
    $region24: #{tpu_custom_call.1} parent=1 // pred_region
      _
    $region25: #{tpu_custom_call.1} parent=1 // pred_fallthru
      _
    // Predicated region
    $region26: #{tpu_custom_call.1} parent=1 // pred_check
      _
    $region27: #{tpu_custom_call.1} parent=1 // pred_check_branch
      %72 = sbr.rel (0) target = $region29
    $region28: #{tpu_custom_call.1} parent=1 // pred_region
      _
    $region29: #{tpu_custom_call.1} parent=1 // pred_fallthru
      _
    // Predicated region
    $region30: #{tpu_custom_call.1} parent=1 // pred_check
      _
    $region31: #{tpu_custom_call.1} parent=1 // pred_check_branch
      %74 = sbr.rel (0) target = $region33
    $region32: #{tpu_custom_call.1} parent=1 // pred_region
      %s76 = ssub.s32 16, 16
      %77 = vsyncadd [#allocation9], %s76
      %s79 = sshll.u32 [#allocation10], 4
      %s80 = int_to_ptr.vmem [resolvable:$true] %s79
      %82 = dma.hbm_to_vmem [thread:$0]  %s7, 16, %s80, [#allocation9]
    $region33: #{tpu_custom_call.1} parent=1 // pred_fallthru
      _
    // Predicated region
    $region34: #{tpu_custom_call.1} parent=1 // pred_check
      _
    $region35: #{tpu_custom_call.1} parent=1 // pred_check_branch
      %84 = sbr.rel (0) target = $region37
    $region36: #{tpu_custom_call.1} parent=1 // pred_region
      %s86 = ssub.s32 8192, 8192
      %87 = vsyncadd [#allocation12], %s86
      %s88 = sshll.u32 [#allocation11], 4
      %s89 = int_to_ptr.vmem [resolvable:$true] %s88
      %94 = dma.hbm_to_vmem [thread:$0]  %s8, 8192, %s89, [#allocation12], 512, 512, 32
    $region37: #{tpu_custom_call.1} parent=1 // pred_fallthru
      _
    // Predicated region
    $region38: #{tpu_custom_call.1} parent=1 // pred_check
      _
    $region39: #{tpu_custom_call.1} parent=1 // pred_check_branch
      %96 = sbr.rel (0) target = $region41
    $region40: #{tpu_custom_call.1} parent=1 // pred_region
      _
    $region41: #{tpu_custom_call.1} parent=1 // pred_fallthru
      _
    // Predicated region
    $region42: #{tpu_custom_call.1} parent=1 // pred_check
      _
    $region43: #{tpu_custom_call.1} parent=1 // pred_check_branch
      %98 = sbr.rel (0) target = $region45
    $region44: #{tpu_custom_call.1} parent=1 // pred_region
      %99 = dma.done [#allocation3], 1024
    $region45: #{tpu_custom_call.1} parent=1 // pred_fallthru
      _
    // Predicated region
    $region46: #{tpu_custom_call.1} parent=1 // pred_check
      _
    $region47: #{tpu_custom_call.1} parent=1 // pred_check_branch
      %101 = sbr.rel (0) target = $region49
    $region48: #{tpu_custom_call.1} parent=1 // pred_region
      %102 = dma.done [#allocation6], 128
    $region49: #{tpu_custom_call.1} parent=1 // pred_fallthru
      _
    // Predicated region
    $region50: #{tpu_custom_call.1} parent=1 // pred_check
      _
    $region51: #{tpu_custom_call.1} parent=1 // pred_check_branch
      %104 = sbr.rel (0) target = $region53
    $region52: #{tpu_custom_call.1} parent=1 // pred_region
      %105 = dma.done [#allocation6], 8192
    $region53: #{tpu_custom_call.1} parent=1 // pred_fallthru
      _
    // Predicated region
    $region54: #{tpu_custom_call.1} parent=1 // pred_check
      _
    $region55: #{tpu_custom_call.1} parent=1 // pred_check_branch
      %107 = sbr.rel (0) target = $region57
    $region56: #{tpu_custom_call.1} parent=1 // pred_region
      %108 = dma.done [#allocation9], 1024
    $region57: #{tpu_custom_call.1} parent=1 // pred_fallthru
      _
    // Predicated region
    $region58: #{tpu_custom_call.1} parent=1 // pred_check
      _
    $region59: #{tpu_custom_call.1} parent=1 // pred_check_branch
      %110 = sbr.rel (0) target = $region61
    $region60: #{tpu_custom_call.1} parent=1 // pred_region
      %111 = dma.done [#allocation9], 16
    $region61: #{tpu_custom_call.1} parent=1 // pred_fallthru
      _
    // Predicated region
    $region62: #{tpu_custom_call.1} parent=1 // pred_check
      _
    $region63: #{tpu_custom_call.1} parent=1 // pred_check_branch
      %113 = sbr.rel (0) target = $region65
    $region64: #{tpu_custom_call.1} parent=1 // pred_region
      %114 = dma.done [#allocation12], 8192
    $region65: #{tpu_custom_call.1} parent=1 // pred_fallthru
      _
    %v116 = vld [vmem:[#allocation2] sm:$0xff]
    %v117 = vld [vmem:[#allocation2 + $0x8] sm:$0xff]
    %v118 = vld [vmem:[#allocation2 + $0x10] sm:$0xff]
    %v119 = vld [vmem:[#allocation2 + $0x18] sm:$0xff]
    %v120 = vld [vmem:[#allocation2 + $0x20] sm:$0xff]
    %v121 = vld [vmem:[#allocation2 + $0x28] sm:$0xff]
    %v122 = vld [vmem:[#allocation2 + $0x30] sm:$0xff]
    %v123 = vld [vmem:[#allocation2 + $0x38] sm:$0xff]
    %v124 = vpack.c.bf16 %v116, %v116
    %v125 = vpack.c.bf16 %v117, %v117
    %v126 = vpack.c.bf16 %v118, %v118
    %v127 = vpack.c.bf16 %v119, %v119
    %v128 = vpack.c.bf16 %v120, %v120
    %v129 = vpack.c.bf16 %v121, %v121
    %v130 = vpack.c.bf16 %v122, %v122
    %v131 = vpack.c.bf16 %v123, %v123
    %v132 = vld [vmem:[#allocation7] sm:$0xf]
    %v133 = vld [vmem:[#allocation7 + $0x4] sm:$0xf]
    %v134 = vld [vmem:[#allocation7 + $0x8] sm:$0xf]
    %v135 = vld [vmem:[#allocation7 + $0xc] sm:$0xf]
    %v136 = vld [vmem:[#allocation7 + $0x10] sm:$0xf]
    %v137 = vld [vmem:[#allocation7 + $0x14] sm:$0xf]
    %v138 = vld [vmem:[#allocation7 + $0x18] sm:$0xf]
    %v139 = vld [vmem:[#allocation7 + $0x1c] sm:$0xf]
    %v140 = vld [vmem:[#allocation7 + $0x20] sm:$0xf]
    %v141 = vld [vmem:[#allocation7 + $0x24] sm:$0xf]
    %v142 = vld [vmem:[#allocation7 + $0x28] sm:$0xf]
    %v143 = vld [vmem:[#allocation7 + $0x2c] sm:$0xf]
    %v144 = vld [vmem:[#allocation7 + $0x30] sm:$0xf]
    %v145 = vld [vmem:[#allocation7 + $0x34] sm:$0xf]
    %v146 = vld [vmem:[#allocation7 + $0x38] sm:$0xf]
    %v147 = vld [vmem:[#allocation7 + $0x3c] sm:$0xf]
    %v148 = vld [vmem:[#allocation7 + $0x40] sm:$0xf]
    %v149 = vld [vmem:[#allocation7 + $0x44] sm:$0xf]
    %v150 = vld [vmem:[#allocation7 + $0x48] sm:$0xf]
    %v151 = vld [vmem:[#allocation7 + $0x4c] sm:$0xf]
    %v152 = vld [vmem:[#allocation7 + $0x50] sm:$0xf]
    %v153 = vld [vmem:[#allocation7 + $0x54] sm:$0xf]
    %v154 = vld [vmem:[#allocation7 + $0x58] sm:$0xf]
    %v155 = vld [vmem:[#allocation7 + $0x5c] sm:$0xf]
    %v156 = vld [vmem:[#allocation7 + $0x60] sm:$0xf]
    %v157 = vld [vmem:[#allocation7 + $0x64] sm:$0xf]
    %v158 = vld [vmem:[#allocation7 + $0x68] sm:$0xf]
    %v159 = vld [vmem:[#allocation7 + $0x6c] sm:$0xf]
    %v160 = vld [vmem:[#allocation7 + $0x70] sm:$0xf]
    %v161 = vld [vmem:[#allocation7 + $0x74] sm:$0xf]
    %v162 = vld [vmem:[#allocation7 + $0x78] sm:$0xf]
    %v163 = vld [vmem:[#allocation7 + $0x7c] sm:$0xf]
    %v164 = vld [vmem:[#allocation7 + $0x80] sm:$0xf]
    %v165 = vld [vmem:[#allocation7 + $0x84] sm:$0xf]
    %v166 = vld [vmem:[#allocation7 + $0x88] sm:$0xf]
    %v167 = vld [vmem:[#allocation7 + $0x8c] sm:$0xf]
    %v168 = vld [vmem:[#allocation7 + $0x90] sm:$0xf]
    %v169 = vld [vmem:[#allocation7 + $0x94] sm:$0xf]
    %v170 = vld [vmem:[#allocation7 + $0x98] sm:$0xf]
    %v171 = vld [vmem:[#allocation7 + $0x9c] sm:$0xf]
    %v172 = vld [vmem:[#allocation7 + $0xa0] sm:$0xf]
    %v173 = vld [vmem:[#allocation7 + $0xa4] sm:$0xf]
    %v174 = vld [vmem:[#allocation7 + $0xa8] sm:$0xf]
    %v175 = vld [vmem:[#allocation7 + $0xac] sm:$0xf]
    %v176 = vld [vmem:[#allocation7 + $0xb0] sm:$0xf]
    %v177 = vld [vmem:[#allocation7 + $0xb4] sm:$0xf]
    %v178 = vld [vmem:[#allocation7 + $0xb8] sm:$0xf]
    %v179 = vld [vmem:[#allocation7 + $0xbc] sm:$0xf]
    %v180 = vld [vmem:[#allocation7 + $0xc0] sm:$0xf]
    %v181 = vld [vmem:[#allocation7 + $0xc4] sm:$0xf]
    %v182 = vld [vmem:[#allocation7 + $0xc8] sm:$0xf]
    %v183 = vld [vmem:[#allocation7 + $0xcc] sm:$0xf]
    %v184 = vld [vmem:[#allocation7 + $0xd0] sm:$0xf]
    %v185 = vld [vmem:[#allocation7 + $0xd4] sm:$0xf]
    %v186 = vld [vmem:[#allocation7 + $0xd8] sm:$0xf]
    %v187 = vld [vmem:[#allocation7 + $0xdc] sm:$0xf]
    %v188 = vld [vmem:[#allocation7 + $0xe0] sm:$0xf]
    %v189 = vld [vmem:[#allocation7 + $0xe4] sm:$0xf]
    %v190 = vld [vmem:[#allocation7 + $0xe8] sm:$0xf]
    %v191 = vld [vmem:[#allocation7 + $0xec] sm:$0xf]
    %v192 = vld [vmem:[#allocation7 + $0xf0] sm:$0xf]
    %v193 = vld [vmem:[#allocation7 + $0xf4] sm:$0xf]
    %v194 = vld [vmem:[#allocation7 + $0xf8] sm:$0xf]
    %v195 = vld [vmem:[#allocation7 + $0xfc] sm:$0xf]
    %v196 = vld [vmem:[#allocation7 + $0x100] sm:$0xf]
    %v197 = vld [vmem:[#allocation7 + $0x104] sm:$0xf]
    %v198 = vld [vmem:[#allocation7 + $0x108] sm:$0xf]
    %v199 = vld [vmem:[#allocation7 + $0x10c] sm:$0xf]
    %v200 = vld [vmem:[#allocation7 + $0x110] sm:$0xf]
    %v201 = vld [vmem:[#allocation7 + $0x114] sm:$0xf]
    %v202 = vld [vmem:[#allocation7 + $0x118] sm:$0xf]
    %v203 = vld [vmem:[#allocation7 + $0x11c] sm:$0xf]
    %v204 = vld [vmem:[#allocation7 + $0x120] sm:$0xf]
    %v205 = vld [vmem:[#allocation7 + $0x124] sm:$0xf]
    %v206 = vld [vmem:[#allocation7 + $0x128] sm:$0xf]
    %v207 = vld [vmem:[#allocation7 + $0x12c] sm:$0xf]
    %v208 = vld [vmem:[#allocation7 + $0x130] sm:$0xf]
    %v209 = vld [vmem:[#allocation7 + $0x134] sm:$0xf]
    %v210 = vld [vmem:[#allocation7 + $0x138] sm:$0xf]
    %v211 = vld [vmem:[#allocation7 + $0x13c] sm:$0xf]
    %v212 = vld [vmem:[#allocation7 + $0x140] sm:$0xf]
    %v213 = vld [vmem:[#allocation7 + $0x144] sm:$0xf]
    %v214 = vld [vmem:[#allocation7 + $0x148] sm:$0xf]
    %v215 = vld [vmem:[#allocation7 + $0x14c] sm:$0xf]
    %v216 = vld [vmem:[#allocation7 + $0x150] sm:$0xf]
    %v217 = vld [vmem:[#allocation7 + $0x154] sm:$0xf]
    %v218 = vld [vmem:[#allocation7 + $0x158] sm:$0xf]
    %v219 = vld [vmem:[#allocation7 + $0x15c] sm:$0xf]
    %v220 = vld [vmem:[#allocation7 + $0x160] sm:$0xf]
    %v221 = vld [vmem:[#allocation7 + $0x164] sm:$0xf]
    %v222 = vld [vmem:[#allocation7 + $0x168] sm:$0xf]
    %v223 = vld [vmem:[#allocation7 + $0x16c] sm:$0xf]
    %v224 = vld [vmem:[#allocation7 + $0x170] sm:$0xf]
    %v225 = vld [vmem:[#allocation7 + $0x174] sm:$0xf]
    %v226 = vld [vmem:[#allocation7 + $0x178] sm:$0xf]
    %v227 = vld [vmem:[#allocation7 + $0x17c] sm:$0xf]
    %v228 = vld [vmem:[#allocation7 + $0x180] sm:$0xf]
    %v229 = vld [vmem:[#allocation7 + $0x184] sm:$0xf]
    %v230 = vld [vmem:[#allocation7 + $0x188] sm:$0xf]
    %v231 = vld [vmem:[#allocation7 + $0x18c] sm:$0xf]
    %v232 = vld [vmem:[#allocation7 + $0x190] sm:$0xf]
    %v233 = vld [vmem:[#allocation7 + $0x194] sm:$0xf]
    %v234 = vld [vmem:[#allocation7 + $0x198] sm:$0xf]
    %v235 = vld [vmem:[#allocation7 + $0x19c] sm:$0xf]
    %v236 = vld [vmem:[#allocation7 + $0x1a0] sm:$0xf]
    %v237 = vld [vmem:[#allocation7 + $0x1a4] sm:$0xf]
    %v238 = vld [vmem:[#allocation7 + $0x1a8] sm:$0xf]
    %v239 = vld [vmem:[#allocation7 + $0x1ac] sm:$0xf]
    %v240 = vld [vmem:[#allocation7 + $0x1b0] sm:$0xf]
    %v241 = vld [vmem:[#allocation7 + $0x1b4] sm:$0xf]
    %v242 = vld [vmem:[#allocation7 + $0x1b8] sm:$0xf]
    %v243 = vld [vmem:[#allocation7 + $0x1bc] sm:$0xf]
    %v244 = vld [vmem:[#allocation7 + $0x1c0] sm:$0xf]
    %v245 = vld [vmem:[#allocation7 + $0x1c4] sm:$0xf]
    %v246 = vld [vmem:[#allocation7 + $0x1c8] sm:$0xf]
    %v247 = vld [vmem:[#allocation7 + $0x1cc] sm:$0xf]
    %v248 = vld [vmem:[#allocation7 + $0x1d0] sm:$0xf]
    %v249 = vld [vmem:[#allocation7 + $0x1d4] sm:$0xf]
    %v250 = vld [vmem:[#allocation7 + $0x1d8] sm:$0xf]
    %v251 = vld [vmem:[#allocation7 + $0x1dc] sm:$0xf]
    %v252 = vld [vmem:[#allocation7 + $0x1e0] sm:$0xf]
    %v253 = vld [vmem:[#allocation7 + $0x1e4] sm:$0xf]
    %v254 = vld [vmem:[#allocation7 + $0x1e8] sm:$0xf]
    %v255 = vld [vmem:[#allocation7 + $0x1ec] sm:$0xf]
    %v256 = vld [vmem:[#allocation7 + $0x1f0] sm:$0xf]
    %v257 = vld [vmem:[#allocation7 + $0x1f4] sm:$0xf]
    %v258 = vld [vmem:[#allocation7 + $0x1f8] sm:$0xf]
    %v259 = vld [vmem:[#allocation7 + $0x1fc] sm:$0xf]
    %v260 = vld [vmem:[%s3] sm:$0x1]
    %v262 = vlaneseq
    %v263 = vshrl.u32 %v262, 7
    %v264 = vsub.s32 0, %v263
    %v265 = vrot.slane %v260, %v264
    %v395 = vunpack.c.l.b16 %v132
    %v396 = vunpack.c.l.b16 %v133
    %v397 = vunpack.c.l.b16 %v134
    %v398 = vunpack.c.l.b16 %v135
    %v399 = vunpack.c.l.b16 %v136
    %v400 = vunpack.c.l.b16 %v137
    %v401 = vunpack.c.l.b16 %v138
    %v402 = vunpack.c.l.b16 %v139
    %v403 = vunpack.c.l.b16 %v140
    %v404 = vunpack.c.l.b16 %v141
    %v405 = vunpack.c.l.b16 %v142
    %v406 = vunpack.c.l.b16 %v143
    %v407 = vunpack.c.l.b16 %v144
    %v408 = vunpack.c.l.b16 %v145
    %v409 = vunpack.c.l.b16 %v146
    %v410 = vunpack.c.l.b16 %v147
    %v411 = vunpack.c.l.b16 %v148
    %v412 = vunpack.c.l.b16 %v149
    %v413 = vunpack.c.l.b16 %v150
    %v414 = vunpack.c.l.b16 %v151
    %v415 = vunpack.c.l.b16 %v152
    %v416 = vunpack.c.l.b16 %v153
    %v417 = vunpack.c.l.b16 %v154
    %v418 = vunpack.c.l.b16 %v155
    %v419 = vunpack.c.l.b16 %v156
    %v420 = vunpack.c.l.b16 %v157
    %v421 = vunpack.c.l.b16 %v158
    %v422 = vunpack.c.l.b16 %v159
    %v423 = vunpack.c.l.b16 %v160
    %v424 = vunpack.c.l.b16 %v161
    %v425 = vunpack.c.l.b16 %v162
    %v426 = vunpack.c.l.b16 %v163
    %v427 = vunpack.c.l.b16 %v164
    %v428 = vunpack.c.l.b16 %v165
    %v429 = vunpack.c.l.b16 %v166
    %v430 = vunpack.c.l.b16 %v167
    %v431 = vunpack.c.l.b16 %v168
    %v432 = vunpack.c.l.b16 %v169
    %v433 = vunpack.c.l.b16 %v170
    %v434 = vunpack.c.l.b16 %v171
    %v435 = vunpack.c.l.b16 %v172
    %v436 = vunpack.c.l.b16 %v173
    %v437 = vunpack.c.l.b16 %v174
    %v438 = vunpack.c.l.b16 %v175
    %v439 = vunpack.c.l.b16 %v176
    %v440 = vunpack.c.l.b16 %v177
    %v441 = vunpack.c.l.b16 %v178
    %v442 = vunpack.c.l.b16 %v179
    %v443 = vunpack.c.l.b16 %v180
    %v444 = vunpack.c.l.b16 %v181
    %v445 = vunpack.c.l.b16 %v182
    %v446 = vunpack.c.l.b16 %v183
    %v447 = vunpack.c.l.b16 %v184
    %v448 = vunpack.c.l.b16 %v185
    %v449 = vunpack.c.l.b16 %v186
    %v450 = vunpack.c.l.b16 %v187
    %v451 = vunpack.c.l.b16 %v188
    %v452 = vunpack.c.l.b16 %v189
    %v453 = vunpack.c.l.b16 %v190
    %v454 = vunpack.c.l.b16 %v191
    %v455 = vunpack.c.l.b16 %v192
    %v456 = vunpack.c.l.b16 %v193
    %v457 = vunpack.c.l.b16 %v194
    %v458 = vunpack.c.l.b16 %v195
    %v459 = vunpack.c.l.b16 %v196
    %v460 = vunpack.c.l.b16 %v197
    %v461 = vunpack.c.l.b16 %v198
    %v462 = vunpack.c.l.b16 %v199
    %v463 = vunpack.c.l.b16 %v200
    %v464 = vunpack.c.l.b16 %v201
    %v465 = vunpack.c.l.b16 %v202
    %v466 = vunpack.c.l.b16 %v203
    %v467 = vunpack.c.l.b16 %v204
    %v468 = vunpack.c.l.b16 %v205
    %v469 = vunpack.c.l.b16 %v206
    %v470 = vunpack.c.l.b16 %v207
    %v471 = vunpack.c.l.b16 %v208
    %v472 = vunpack.c.l.b16 %v209
    %v473 = vunpack.c.l.b16 %v210
    %v474 = vunpack.c.l.b16 %v211
    %v475 = vunpack.c.l.b16 %v212
    %v476 = vunpack.c.l.b16 %v213
    %v477 = vunpack.c.l.b16 %v214
    %v478 = vunpack.c.l.b16 %v215
    %v479 = vunpack.c.l.b16 %v216
    %v480 = vunpack.c.l.b16 %v217
    %v481 = vunpack.c.l.b16 %v218
    %v482 = vunpack.c.l.b16 %v219
    %v483 = vunpack.c.l.b16 %v220
    %v484 = vunpack.c.l.b16 %v221
    %v485 = vunpack.c.l.b16 %v222
    %v486 = vunpack.c.l.b16 %v223
    %v487 = vunpack.c.l.b16 %v224
    %v488 = vunpack.c.l.b16 %v225
    %v489 = vunpack.c.l.b16 %v226
    %v490 = vunpack.c.l.b16 %v227
    %v491 = vunpack.c.l.b16 %v228
    %v492 = vunpack.c.l.b16 %v229
    %v493 = vunpack.c.l.b16 %v230
    %v494 = vunpack.c.l.b16 %v231
    %v495 = vunpack.c.l.b16 %v232
    %v496 = vunpack.c.l.b16 %v233
    %v497 = vunpack.c.l.b16 %v234
    %v498 = vunpack.c.l.b16 %v235
    %v499 = vunpack.c.l.b16 %v236
    %v500 = vunpack.c.l.b16 %v237
    %v501 = vunpack.c.l.b16 %v238
    %v502 = vunpack.c.l.b16 %v239
    %v503 = vunpack.c.l.b16 %v240
    %v504 = vunpack.c.l.b16 %v241
    %v505 = vunpack.c.l.b16 %v242
    %v506 = vunpack.c.l.b16 %v243
    %v507 = vunpack.c.l.b16 %v244
    %v508 = vunpack.c.l.b16 %v245
    %v509 = vunpack.c.l.b16 %v246
    %v510 = vunpack.c.l.b16 %v247
    %v511 = vunpack.c.l.b16 %v248
    %v512 = vunpack.c.l.b16 %v249
    %v513 = vunpack.c.l.b16 %v250
    %v514 = vunpack.c.l.b16 %v251
    %v515 = vunpack.c.l.b16 %v252
    %v516 = vunpack.c.l.b16 %v253
    %v517 = vunpack.c.l.b16 %v254
    %v518 = vunpack.c.l.b16 %v255
    %v519 = vunpack.c.l.b16 %v256
    %v520 = vunpack.c.l.b16 %v257
    %v521 = vunpack.c.l.b16 %v258
    %v522 = vunpack.c.l.b16 %v259
    %v523 = vpack.c.b16 %v396, %v395
    %v524 = vpack.c.b16 %v398, %v397
    %v525 = vpack.c.b16 %v400, %v399
    %v526 = vpack.c.b16 %v402, %v401
    %v527 = vpack.c.b16 %v404, %v403
    %v528 = vpack.c.b16 %v406, %v405
    %v529 = vpack.c.b16 %v408, %v407
    %v530 = vpack.c.b16 %v410, %v409
    %v531 = vpack.c.b16 %v412, %v411
    %v532 = vpack.c.b16 %v414, %v413
    %v533 = vpack.c.b16 %v416, %v415
    %v534 = vpack.c.b16 %v418, %v417
    %v535 = vpack.c.b16 %v420, %v419
    %v536 = vpack.c.b16 %v422, %v421
    %v537 = vpack.c.b16 %v424, %v423
    %v538 = vpack.c.b16 %v426, %v425
    %v539 = vpack.c.b16 %v428, %v427
    %v540 = vpack.c.b16 %v430, %v429
    %v541 = vpack.c.b16 %v432, %v431
    %v542 = vpack.c.b16 %v434, %v433
    %v543 = vpack.c.b16 %v436, %v435
    %v544 = vpack.c.b16 %v438, %v437
    %v545 = vpack.c.b16 %v440, %v439
    %v546 = vpack.c.b16 %v442, %v441
    %v547 = vpack.c.b16 %v444, %v443
    %v548 = vpack.c.b16 %v446, %v445
    %v549 = vpack.c.b16 %v448, %v447
    %v550 = vpack.c.b16 %v450, %v449
    %v551 = vpack.c.b16 %v452, %v451
    %v552 = vpack.c.b16 %v454, %v453
    %v553 = vpack.c.b16 %v456, %v455
    %v554 = vpack.c.b16 %v458, %v457
    %v555 = vpack.c.b16 %v460, %v459
    %v556 = vpack.c.b16 %v462, %v461
    %v557 = vpack.c.b16 %v464, %v463
    %v558 = vpack.c.b16 %v466, %v465
    %v559 = vpack.c.b16 %v468, %v467
    %v560 = vpack.c.b16 %v470, %v469
    %v561 = vpack.c.b16 %v472, %v471
    %v562 = vpack.c.b16 %v474, %v473
    %v563 = vpack.c.b16 %v476, %v475
    %v564 = vpack.c.b16 %v478, %v477
    %v565 = vpack.c.b16 %v480, %v479
    %v566 = vpack.c.b16 %v482, %v481
    %v567 = vpack.c.b16 %v484, %v483
    %v568 = vpack.c.b16 %v486, %v485
    %v569 = vpack.c.b16 %v488, %v487
    %v570 = vpack.c.b16 %v490, %v489
    %v571 = vpack.c.b16 %v492, %v491
    %v572 = vpack.c.b16 %v494, %v493
    %v573 = vpack.c.b16 %v496, %v495
    %v574 = vpack.c.b16 %v498, %v497
    %v575 = vpack.c.b16 %v500, %v499
    %v576 = vpack.c.b16 %v502, %v501
    %v577 = vpack.c.b16 %v504, %v503
    %v578 = vpack.c.b16 %v506, %v505
    %v579 = vpack.c.b16 %v508, %v507
    %v580 = vpack.c.b16 %v510, %v509
    %v581 = vpack.c.b16 %v512, %v511
    %v582 = vpack.c.b16 %v514, %v513
    %v583 = vpack.c.b16 %v516, %v515
    %v584 = vpack.c.b16 %v518, %v517
    %v585 = vpack.c.b16 %v520, %v519
    %v586 = vpack.c.b16 %v522, %v521
    %651 = vmatprep.subr.bf16.mxu0 0
    %652 = vmatpush1.bf16.msra.mxu0 %v523
    %653 = vmatprep.subr.bf16.mxu0 0
    %654 = vmatpush1.bf16.msra.mxu0 %v524
    %655 = vmatprep.subr.bf16.mxu0 0
    %656 = vmatpush1.bf16.msra.mxu0 %v525
    %657 = vmatprep.subr.bf16.mxu0 0
    %658 = vmatpush1.bf16.msra.mxu0 %v526
    %659 = vmatprep.subr.bf16.mxu0 0
    %660 = vmatpush1.bf16.msra.mxu0 %v527
    %661 = vmatprep.subr.bf16.mxu0 0
    %662 = vmatpush1.bf16.msra.mxu0 %v528
    %663 = vmatprep.subr.bf16.mxu0 0
    %664 = vmatpush1.bf16.msra.mxu0 %v529
    %665 = vmatprep.subr.bf16.mxu0 0
    %666 = vmatpush1.bf16.msra.mxu0 %v530
    %667 = vmatprep.subr.bf16.mxu0 0
    %668 = vmatpush1.bf16.msra.mxu0 %v531
    %669 = vmatprep.subr.bf16.mxu0 0
    %670 = vmatpush1.bf16.msra.mxu0 %v532
    %671 = vmatprep.subr.bf16.mxu0 0
    %672 = vmatpush1.bf16.msra.mxu0 %v533
    %673 = vmatprep.subr.bf16.mxu0 0
    %674 = vmatpush1.bf16.msra.mxu0 %v534
    %675 = vmatprep.subr.bf16.mxu0 0
    %676 = vmatpush1.bf16.msra.mxu0 %v535
    %677 = vmatprep.subr.bf16.mxu0 0
    %678 = vmatpush1.bf16.msra.mxu0 %v536
    %679 = vmatprep.subr.bf16.mxu0 0
    %680 = vmatpush1.bf16.msra.mxu0 %v537
    %681 = vmatprep.subr.bf16.mxu0 0
    %682 = vmatpush1.bf16.msra.mxu0 %v538
    %683 = vmatprep.mubr.bf16.mxu0 %v125
    %684 = vmatmul.mubr.bf16.gmra.mrb[0].mxu0 %v124
    %v685 = vpop.f32.mrb[0].mxu0
    %v686 = vadd.f32 %v265, %v685
    %v687 = vpop.f32.mrb[0].mxu0
    %v688 = vpop.f32.mrb[0].mxu0
    %v689 = vpop.f32.mrb[0].mxu0
    %690 = vdwg.mxu0
    %691 = vmatprep.subr.bf16.mxu0 0
    %692 = vmatpush1.bf16.msra.mxu0 %v539
    %693 = vmatprep.subr.bf16.mxu0 0
    %694 = vmatpush1.bf16.msra.mxu0 %v540
    %695 = vmatprep.subr.bf16.mxu0 0
    %696 = vmatpush1.bf16.msra.mxu0 %v541
    %697 = vmatprep.subr.bf16.mxu0 0
    %698 = vmatpush1.bf16.msra.mxu0 %v542
    %699 = vmatprep.subr.bf16.mxu0 0
    %700 = vmatpush1.bf16.msra.mxu0 %v543
    %701 = vmatprep.subr.bf16.mxu0 0
    %702 = vmatpush1.bf16.msra.mxu0 %v544
    %703 = vmatprep.subr.bf16.mxu0 0
    %704 = vmatpush1.bf16.msra.mxu0 %v545
    %705 = vmatprep.subr.bf16.mxu0 0
    %706 = vmatpush1.bf16.msra.mxu0 %v546
    %707 = vmatprep.subr.bf16.mxu0 0
    %708 = vmatpush1.bf16.msra.mxu0 %v547
    %709 = vmatprep.subr.bf16.mxu0 0
    %710 = vmatpush1.bf16.msra.mxu0 %v548
    %711 = vmatprep.subr.bf16.mxu0 0
    %712 = vmatpush1.bf16.msra.mxu0 %v549
    %713 = vmatprep.subr.bf16.mxu0 0
    %714 = vmatpush1.bf16.msra.mxu0 %v550
    %715 = vmatprep.subr.bf16.mxu0 0
    %716 = vmatpush1.bf16.msra.mxu0 %v551
    %717 = vmatprep.subr.bf16.mxu0 0
    %718 = vmatpush1.bf16.msra.mxu0 %v552
    %719 = vmatprep.subr.bf16.mxu0 0
    %720 = vmatpush1.bf16.msra.mxu0 %v553
    %721 = vmatprep.subr.bf16.mxu0 0
    %722 = vmatpush1.bf16.msra.mxu0 %v554
    %723 = vmatprep.mubr.bf16.mxu0 %v127
    %724 = vmatmul.mubr.bf16.gmra.mrb[0].mxu0 %v126
    %v725 = vpop.f32.mrb[0].mxu0
    %v726 = vadd.f32 %v686, %v725
    %v727 = vpop.f32.mrb[0].mxu0
    %v728 = vpop.f32.mrb[0].mxu0
    %v729 = vpop.f32.mrb[0].mxu0
    %730 = vdwg.mxu0
    %731 = vmatprep.subr.bf16.mxu0 0
    %732 = vmatpush1.bf16.msra.mxu0 %v555
    %733 = vmatprep.subr.bf16.mxu0 0
    %734 = vmatpush1.bf16.msra.mxu0 %v556
    %735 = vmatprep.subr.bf16.mxu0 0
    %736 = vmatpush1.bf16.msra.mxu0 %v557
    %737 = vmatprep.subr.bf16.mxu0 0
    %738 = vmatpush1.bf16.msra.mxu0 %v558
    %739 = vmatprep.subr.bf16.mxu0 0
    %740 = vmatpush1.bf16.msra.mxu0 %v559
    %741 = vmatprep.subr.bf16.mxu0 0
    %742 = vmatpush1.bf16.msra.mxu0 %v560
    %743 = vmatprep.subr.bf16.mxu0 0
    %744 = vmatpush1.bf16.msra.mxu0 %v561
    %745 = vmatprep.subr.bf16.mxu0 0
    %746 = vmatpush1.bf16.msra.mxu0 %v562
    %747 = vmatprep.subr.bf16.mxu0 0
    %748 = vmatpush1.bf16.msra.mxu0 %v563
    %749 = vmatprep.subr.bf16.mxu0 0
    %750 = vmatpush1.bf16.msra.mxu0 %v564
    %751 = vmatprep.subr.bf16.mxu0 0
    %752 = vmatpush1.bf16.msra.mxu0 %v565
    %753 = vmatprep.subr.bf16.mxu0 0
    %754 = vmatpush1.bf16.msra.mxu0 %v566
    %755 = vmatprep.subr.bf16.mxu0 0
    %756 = vmatpush1.bf16.msra.mxu0 %v567
    %757 = vmatprep.subr.bf16.mxu0 0
    %758 = vmatpush1.bf16.msra.mxu0 %v568
    %759 = vmatprep.subr.bf16.mxu0 0
    %760 = vmatpush1.bf16.msra.mxu0 %v569
    %761 = vmatprep.subr.bf16.mxu0 0
    %762 = vmatpush1.bf16.msra.mxu0 %v570
    %763 = vmatprep.mubr.bf16.mxu0 %v129
    %764 = vmatmul.mubr.bf16.gmra.mrb[0].mxu0 %v128
    %v765 = vpop.f32.mrb[0].mxu0
    %v766 = vadd.f32 %v726, %v765
    %v767 = vpop.f32.mrb[0].mxu0
    %v768 = vpop.f32.mrb[0].mxu0
    %v769 = vpop.f32.mrb[0].mxu0
    %770 = vdwg.mxu0
    %771 = vmatprep.subr.bf16.mxu0 0
    %772 = vmatpush1.bf16.msra.mxu0 %v571
    %773 = vmatprep.subr.bf16.mxu0 0
    %774 = vmatpush1.bf16.msra.mxu0 %v572
    %775 = vmatprep.subr.bf16.mxu0 0
    %776 = vmatpush1.bf16.msra.mxu0 %v573
    %777 = vmatprep.subr.bf16.mxu0 0
    %778 = vmatpush1.bf16.msra.mxu0 %v574
    %779 = vmatprep.subr.bf16.mxu0 0
    %780 = vmatpush1.bf16.msra.mxu0 %v575
    %781 = vmatprep.subr.bf16.mxu0 0
    %782 = vmatpush1.bf16.msra.mxu0 %v576
    %783 = vmatprep.subr.bf16.mxu0 0
    %784 = vmatpush1.bf16.msra.mxu0 %v577
    %785 = vmatprep.subr.bf16.mxu0 0
    %786 = vmatpush1.bf16.msra.mxu0 %v578
    %787 = vmatprep.subr.bf16.mxu0 0
    %788 = vmatpush1.bf16.msra.mxu0 %v579
    %789 = vmatprep.subr.bf16.mxu0 0
    %790 = vmatpush1.bf16.msra.mxu0 %v580
    %791 = vmatprep.subr.bf16.mxu0 0
    %792 = vmatpush1.bf16.msra.mxu0 %v581
    %793 = vmatprep.subr.bf16.mxu0 0
    %794 = vmatpush1.bf16.msra.mxu0 %v582
    %795 = vmatprep.subr.bf16.mxu0 0
    %796 = vmatpush1.bf16.msra.mxu0 %v583
    %797 = vmatprep.subr.bf16.mxu0 0
    %798 = vmatpush1.bf16.msra.mxu0 %v584
    %799 = vmatprep.subr.bf16.mxu0 0
    %800 = vmatpush1.bf16.msra.mxu0 %v585
    %801 = vmatprep.subr.bf16.mxu0 0
    %802 = vmatpush1.bf16.msra.mxu0 %v586
    %803 = vmatprep.mubr.bf16.mxu0 %v131
    %804 = vmatmul.mubr.bf16.gmra.mrb[0].mxu0 %v130
    %v805 = vpop.f32.mrb[0].mxu0
    %v806 = vadd.f32 %v766, %v805
    %v807 = vpop.f32.mrb[0].mxu0
    %v808 = vpop.f32.mrb[0].mxu0
    %v809 = vpop.f32.mrb[0].mxu0
    %810 = vdwg.mxu0
    %v811 = vmax.f32 %v806, 0.0
    %v812 = vpack.c.bf16 %v811, %v811
    %v813 = vld [vmem:[#allocation8] sm:$0xf]
    %v814 = vld [vmem:[#allocation8 + $0x4] sm:$0xf]
    %v815 = vld [vmem:[#allocation8 + $0x8] sm:$0xf]
    %v816 = vld [vmem:[#allocation8 + $0xc] sm:$0xf]
    %v817 = vld [vmem:[#allocation8 + $0x10] sm:$0xf]
    %v818 = vld [vmem:[#allocation8 + $0x14] sm:$0xf]
    %v819 = vld [vmem:[#allocation8 + $0x18] sm:$0xf]
    %v820 = vld [vmem:[#allocation8 + $0x1c] sm:$0xf]
    %v821 = vld [vmem:[#allocation8 + $0x20] sm:$0xf]
    %v822 = vld [vmem:[#allocation8 + $0x24] sm:$0xf]
    %v823 = vld [vmem:[#allocation8 + $0x28] sm:$0xf]
    %v824 = vld [vmem:[#allocation8 + $0x2c] sm:$0xf]
    %v825 = vld [vmem:[#allocation8 + $0x30] sm:$0xf]
    %v826 = vld [vmem:[#allocation8 + $0x34] sm:$0xf]
    %v827 = vld [vmem:[#allocation8 + $0x38] sm:$0xf]
    %v828 = vld [vmem:[#allocation8 + $0x3c] sm:$0xf]
    %v829 = vld [vmem:[%s5] sm:$0x1]
    %v831 = vlaneseq
    %v832 = vshrl.u32 %v831, 7
    %v833 = vsub.s32 0, %v832
    %v834 = vrot.slane %v829, %v833
    %v852 = vunpack.c.l.b16 %v813
    %v853 = vunpack.c.l.b16 %v814
    %v854 = vunpack.c.l.b16 %v815
    %v855 = vunpack.c.l.b16 %v816
    %v856 = vunpack.c.l.b16 %v817
    %v857 = vunpack.c.l.b16 %v818
    %v858 = vunpack.c.l.b16 %v819
    %v859 = vunpack.c.l.b16 %v820
    %v860 = vunpack.c.l.b16 %v821
    %v861 = vunpack.c.l.b16 %v822
    %v862 = vunpack.c.l.b16 %v823
    %v863 = vunpack.c.l.b16 %v824
    %v864 = vunpack.c.l.b16 %v825
    %v865 = vunpack.c.l.b16 %v826
    %v866 = vunpack.c.l.b16 %v827
    %v867 = vunpack.c.l.b16 %v828
    %v868 = vpack.c.b16 %v853, %v852
    %v869 = vpack.c.b16 %v855, %v854
    %v870 = vpack.c.b16 %v857, %v856
    %v871 = vpack.c.b16 %v859, %v858
    %v872 = vpack.c.b16 %v861, %v860
    %v873 = vpack.c.b16 %v863, %v862
    %v874 = vpack.c.b16 %v865, %v864
    %v875 = vpack.c.b16 %v867, %v866
    %884 = vmatprep.subr.bf16.mxu0 0
    %885 = vmatpush1.bf16.msra.mxu0 %v868
    %886 = vmatprep.subr.bf16.mxu0 0
    %887 = vmatpush1.bf16.msra.mxu0 %v869
    %888 = vmatprep.subr.bf16.mxu0 0
    %889 = vmatpush1.bf16.msra.mxu0 %v870
    %890 = vmatprep.subr.bf16.mxu0 0
    %891 = vmatpush1.bf16.msra.mxu0 %v871
    %892 = vmatprep.subr.bf16.mxu0 0
    %893 = vmatpush1.bf16.msra.mxu0 %v872
    %894 = vmatprep.subr.bf16.mxu0 0
    %895 = vmatpush1.bf16.msra.mxu0 %v873
    %896 = vmatprep.subr.bf16.mxu0 0
    %897 = vmatpush1.bf16.msra.mxu0 %v874
    %898 = vmatprep.subr.bf16.mxu0 0
    %899 = vmatpush1.bf16.msra.mxu0 %v875
    %900 = vmatprep.subr.bf16.mxu0 0
    %901 = vmatpush1.bf16.msra.mxu0 0
    %902 = vmatprep.subr.bf16.mxu0 0
    %903 = vmatpush1.bf16.msra.mxu0 0
    %904 = vmatprep.subr.bf16.mxu0 0
    %905 = vmatpush1.bf16.msra.mxu0 0
    %906 = vmatprep.subr.bf16.mxu0 0
    %907 = vmatpush1.bf16.msra.mxu0 0
    %908 = vmatprep.subr.bf16.mxu0 0
    %909 = vmatpush1.bf16.msra.mxu0 0
    %910 = vmatprep.subr.bf16.mxu0 0
    %911 = vmatpush1.bf16.msra.mxu0 0
    %912 = vmatprep.subr.bf16.mxu0 0
    %913 = vmatpush1.bf16.msra.mxu0 0
    %914 = vmatprep.subr.bf16.mxu0 0
    %915 = vmatpush1.bf16.msra.mxu0 0
    %916 = vmatprep.mubr.bf16.mxu0 0
    %917 = vmatmul.mubr.bf16.gmra.mrb[0].mxu0 %v812
    %v918 = vpop.f32.mrb[0].mxu0
    %v919 = vadd.f32 %v834, %v918
    %v920 = vpop.f32.mrb[0].mxu0
    %v921 = vpop.f32.mrb[0].mxu0
    %v922 = vpop.f32.mrb[0].mxu0
    %923 = vdwg.mxu0
    %v924 = vmul.f32 %v919, 0.5
    %v925 = vmul.f32 %v924, 1.442695
    %v926 = vpow.pop %v925
    %v927 = vld [vmem:[#allocation5] sm:$0xff]
    %929 = vrot.lane.b32.xlu0 %v926, 96
    %v930 = vpop.permute.xlu0 %929
    %v932 = vmul.f32 %v927, %v930
    %v933 = vadd.f32 %v932, %v919
    %v934 = vpack.c.bf16 %v933, %v933
    %v935 = vld [vmem:[%s6] sm:$0xf]
    %v936 = vld [vmem:[%s6 + $0x4] sm:$0xf]
    %v937 = vld [vmem:[%s6 + $0x8] sm:$0xf]
    %v938 = vld [vmem:[%s6 + $0xc] sm:$0xf]
    %v939 = vld [vmem:[#allocation10] sm:$0x1]
    %v941 = vlaneseq
    %v942 = vshrl.u32 %v941, 7
    %v943 = vsub.s32 0, %v942
    %v944 = vrot.slane %v939, %v943
    %v950 = vunpack.c.l.b16 %v935
    %v951 = vunpack.c.l.b16 %v936
    %v952 = vunpack.c.l.b16 %v937
    %v953 = vunpack.c.l.b16 %v938
    %v954 = vpack.c.b16 %v951, %v950
    %v955 = vpack.c.b16 %v953, %v952
    %vm958 = vcmask 261120
    %v960 = vsel %vm958, %v934, 0
    %962 = vmatprep.subr.bf16.mxu0 0
    %963 = vmatpush1.bf16.msra.mxu0 %v954
    %964 = vmatprep.subr.bf16.mxu0 0
    %965 = vmatpush1.bf16.msra.mxu0 %v955
    %966 = vmatprep.subr.bf16.mxu0 0
    %967 = vmatpush1.bf16.msra.mxu0 0
    %968 = vmatprep.subr.bf16.mxu0 0
    %969 = vmatpush1.bf16.msra.mxu0 0
    %970 = vmatprep.subr.bf16.mxu0 0
    %971 = vmatpush1.bf16.msra.mxu0 0
    %972 = vmatprep.subr.bf16.mxu0 0
    %973 = vmatpush1.bf16.msra.mxu0 0
    %974 = vmatprep.subr.bf16.mxu0 0
    %975 = vmatpush1.bf16.msra.mxu0 0
    %976 = vmatprep.subr.bf16.mxu0 0
    %977 = vmatpush1.bf16.msra.mxu0 0
    %978 = vmatprep.subr.bf16.mxu0 0
    %979 = vmatpush1.bf16.msra.mxu0 0
    %980 = vmatprep.subr.bf16.mxu0 0
    %981 = vmatpush1.bf16.msra.mxu0 0
    %982 = vmatprep.subr.bf16.mxu0 0
    %983 = vmatpush1.bf16.msra.mxu0 0
    %984 = vmatprep.subr.bf16.mxu0 0
    %985 = vmatpush1.bf16.msra.mxu0 0
    %986 = vmatprep.subr.bf16.mxu0 0
    %987 = vmatpush1.bf16.msra.mxu0 0
    %988 = vmatprep.subr.bf16.mxu0 0
    %989 = vmatpush1.bf16.msra.mxu0 0
    %990 = vmatprep.subr.bf16.mxu0 0
    %991 = vmatpush1.bf16.msra.mxu0 0
    %992 = vmatprep.subr.bf16.mxu0 0
    %993 = vmatpush1.bf16.msra.mxu0 0
    %994 = vmatprep.mubr.bf16.mxu0 0
    %995 = vmatmul.mubr.bf16.gmra.mrb[0].mxu0 %v960
    %v996 = vpop.f32.mrb[0].mxu0
    %v997 = vadd.f32 %v944, %v996
    %v998 = vpop.f32.mrb[0].mxu0
    %v999 = vpop.f32.mrb[0].mxu0
    %v1000 = vpop.f32.mrb[0].mxu0
    %1001 = vdwg.mxu0
    %v1002 = vmax.f32 %v997, 0.0
    %v1003 = vpack.c.bf16 %v1002, %v1002
    %v1004 = vld [vmem:[#allocation11] sm:$0xff]
    %v1005 = vld [vmem:[#allocation11 + $0x8] sm:$0xff]
    %v1006 = vld [vmem:[#allocation11 + $0x10] sm:$0xff]
    %v1007 = vld [vmem:[#allocation11 + $0x18] sm:$0xff]
    %v1008 = vld [vmem:[#allocation11 + $0x20] sm:$0xff]
    %v1009 = vld [vmem:[#allocation11 + $0x28] sm:$0xff]
    %v1010 = vld [vmem:[#allocation11 + $0x30] sm:$0xff]
    %v1011 = vld [vmem:[#allocation11 + $0x38] sm:$0xff]
    %v1012 = vld [vmem:[#allocation11 + $0x40] sm:$0xff]
    %v1013 = vld [vmem:[#allocation11 + $0x48] sm:$0xff]
    %v1014 = vld [vmem:[#allocation11 + $0x50] sm:$0xff]
    %v1015 = vld [vmem:[#allocation11 + $0x58] sm:$0xff]
    %v1016 = vld [vmem:[#allocation11 + $0x60] sm:$0xff]
    %v1017 = vld [vmem:[#allocation11 + $0x68] sm:$0xff]
    %v1018 = vld [vmem:[#allocation11 + $0x70] sm:$0xff]
    %v1019 = vld [vmem:[#allocation11 + $0x78] sm:$0xff]
    %v1020 = vld [vmem:[#allocation11 + $0x80] sm:$0xff]
    %v1021 = vld [vmem:[#allocation11 + $0x88] sm:$0xff]
    %v1022 = vld [vmem:[#allocation11 + $0x90] sm:$0xff]
    %v1023 = vld [vmem:[#allocation11 + $0x98] sm:$0xff]
    %v1024 = vld [vmem:[#allocation11 + $0xa0] sm:$0xff]
    %v1025 = vld [vmem:[#allocation11 + $0xa8] sm:$0xff]
    %v1026 = vld [vmem:[#allocation11 + $0xb0] sm:$0xff]
    %v1027 = vld [vmem:[#allocation11 + $0xb8] sm:$0xff]
    %v1028 = vld [vmem:[#allocation11 + $0xc0] sm:$0xff]
    %v1029 = vld [vmem:[#allocation11 + $0xc8] sm:$0xff]
    %v1030 = vld [vmem:[#allocation11 + $0xd0] sm:$0xff]
    %v1031 = vld [vmem:[#allocation11 + $0xd8] sm:$0xff]
    %v1032 = vld [vmem:[#allocation11 + $0xe0] sm:$0xff]
    %v1033 = vld [vmem:[#allocation11 + $0xe8] sm:$0xff]
    %v1034 = vld [vmem:[#allocation11 + $0xf0] sm:$0xff]
    %v1035 = vld [vmem:[#allocation11 + $0xf8] sm:$0xff]
    %v1036 = vld [vmem:[#allocation11 + $0x100] sm:$0xff]
    %v1037 = vld [vmem:[#allocation11 + $0x108] sm:$0xff]
    %v1038 = vld [vmem:[#allocation11 + $0x110] sm:$0xff]
    %v1039 = vld [vmem:[#allocation11 + $0x118] sm:$0xff]
    %v1040 = vld [vmem:[#allocation11 + $0x120] sm:$0xff]
    %v1041 = vld [vmem:[#allocation11 + $0x128] sm:$0xff]
    %v1042 = vld [vmem:[#allocation11 + $0x130] sm:$0xff]
    %v1043 = vld [vmem:[#allocation11 + $0x138] sm:$0xff]
    %v1044 = vld [vmem:[#allocation11 + $0x140] sm:$0xff]
    %v1045 = vld [vmem:[#allocation11 + $0x148] sm:$0xff]
    %v1046 = vld [vmem:[#allocation11 + $0x150] sm:$0xff]
    %v1047 = vld [vmem:[#allocation11 + $0x158] sm:$0xff]
    %v1048 = vld [vmem:[#allocation11 + $0x160] sm:$0xff]
    %v1049 = vld [vmem:[#allocation11 + $0x168] sm:$0xff]
    %v1050 = vld [vmem:[#allocation11 + $0x170] sm:$0xff]
    %v1051 = vld [vmem:[#allocation11 + $0x178] sm:$0xff]
    %v1052 = vld [vmem:[#allocation11 + $0x180] sm:$0xff]
    %v1053 = vld [vmem:[#allocation11 + $0x188] sm:$0xff]
    %v1054 = vld [vmem:[#allocation11 + $0x190] sm:$0xff]
    %v1055 = vld [vmem:[#allocation11 + $0x198] sm:$0xff]
    %v1056 = vld [vmem:[#allocation11 + $0x1a0] sm:$0xff]
    %v1057 = vld [vmem:[#allocation11 + $0x1a8] sm:$0xff]
    %v1058 = vld [vmem:[#allocation11 + $0x1b0] sm:$0xff]
    %v1059 = vld [vmem:[#allocation11 + $0x1b8] sm:$0xff]
    %v1060 = vld [vmem:[#allocation11 + $0x1c0] sm:$0xff]
    %v1061 = vld [vmem:[#allocation11 + $0x1c8] sm:$0xff]
    %v1062 = vld [vmem:[#allocation11 + $0x1d0] sm:$0xff]
    %v1063 = vld [vmem:[#allocation11 + $0x1d8] sm:$0xff]
    %v1064 = vld [vmem:[#allocation11 + $0x1e0] sm:$0xff]
    %v1065 = vld [vmem:[#allocation11 + $0x1e8] sm:$0xff]
    %v1066 = vld [vmem:[#allocation11 + $0x1f0] sm:$0xff]
    %v1067 = vld [vmem:[#allocation11 + $0x1f8] sm:$0xff]
    %v1068 = vld [vmem:[%s9] sm:$0xff]
    %v1070 = vlaneseq
    %v1071 = vshrl.u32 %v1070, 7
    %v1072 = vsub.s32 0, %v1071
    %v1073 = vrot.slane %v1068, %v1072
    %v1074 = vlaneseq
    %v1075 = vshrl.u32 %v1074, 7
    %v1076 = vsub.s32 1, %v1075
    %v1077 = vrot.slane %v1068, %v1076
    %v1078 = vlaneseq
    %v1079 = vshrl.u32 %v1078, 7
    %v1080 = vsub.s32 2, %v1079
    %v1081 = vrot.slane %v1068, %v1080
    %v1082 = vlaneseq
    %v1083 = vshrl.u32 %v1082, 7
    %v1084 = vsub.s32 3, %v1083
    %v1085 = vrot.slane %v1068, %v1084
    %v1086 = vlaneseq
    %v1087 = vshrl.u32 %v1086, 7
    %v1088 = vsub.s32 4, %v1087
    %v1089 = vrot.slane %v1068, %v1088
    %v1090 = vlaneseq
    %v1091 = vshrl.u32 %v1090, 7
    %v1092 = vsub.s32 5, %v1091
    %v1093 = vrot.slane %v1068, %v1092
    %v1094 = vlaneseq
    %v1095 = vshrl.u32 %v1094, 7
    %v1096 = vsub.s32 6, %v1095
    %v1097 = vrot.slane %v1068, %v1096
    %v1098 = vlaneseq
    %v1099 = vshrl.u32 %v1098, 7
    %v1100 = vsub.s32 7, %v1099
    %v1101 = vrot.slane %v1068, %v1100
    %v1174 = vunpack.c.l.b16 %v1004
    %v1175 = vunpack.c.h.b16 %v1004
    %v1176 = vunpack.c.l.b16 %v1005
    %v1177 = vunpack.c.h.b16 %v1005
    %v1178 = vunpack.c.l.b16 %v1006
    %v1179 = vunpack.c.h.b16 %v1006
    %v1180 = vunpack.c.l.b16 %v1007
    %v1181 = vunpack.c.h.b16 %v1007
    %v1182 = vunpack.c.l.b16 %v1008
    %v1183 = vunpack.c.h.b16 %v1008
    %v1184 = vunpack.c.l.b16 %v1009
    %v1185 = vunpack.c.h.b16 %v1009
    %v1186 = vunpack.c.l.b16 %v1010
    %v1187 = vunpack.c.h.b16 %v1010
    %v1188 = vunpack.c.l.b16 %v1011
    %v1189 = vunpack.c.h.b16 %v1011
    %v1190 = vunpack.c.l.b16 %v1012
    %v1191 = vunpack.c.h.b16 %v1012
    %v1192 = vunpack.c.l.b16 %v1013
    %v1193 = vunpack.c.h.b16 %v1013
    %v1194 = vunpack.c.l.b16 %v1014
    %v1195 = vunpack.c.h.b16 %v1014
    %v1196 = vunpack.c.l.b16 %v1015
    %v1197 = vunpack.c.h.b16 %v1015
    %v1198 = vunpack.c.l.b16 %v1016
    %v1199 = vunpack.c.h.b16 %v1016
    %v1200 = vunpack.c.l.b16 %v1017
    %v1201 = vunpack.c.h.b16 %v1017
    %v1202 = vunpack.c.l.b16 %v1018
    %v1203 = vunpack.c.h.b16 %v1018
    %v1204 = vunpack.c.l.b16 %v1019
    %v1205 = vunpack.c.h.b16 %v1019
    %v1206 = vunpack.c.l.b16 %v1020
    %v1207 = vunpack.c.h.b16 %v1020
    %v1208 = vunpack.c.l.b16 %v1021
    %v1209 = vunpack.c.h.b16 %v1021
    %v1210 = vunpack.c.l.b16 %v1022
    %v1211 = vunpack.c.h.b16 %v1022
    %v1212 = vunpack.c.l.b16 %v1023
    %v1213 = vunpack.c.h.b16 %v1023
    %v1214 = vunpack.c.l.b16 %v1024
    %v1215 = vunpack.c.h.b16 %v1024
    %v1216 = vunpack.c.l.b16 %v1025
    %v1217 = vunpack.c.h.b16 %v1025
    %v1218 = vunpack.c.l.b16 %v1026
    %v1219 = vunpack.c.h.b16 %v1026
    %v1220 = vunpack.c.l.b16 %v1027
    %v1221 = vunpack.c.h.b16 %v1027
    %v1222 = vunpack.c.l.b16 %v1028
    %v1223 = vunpack.c.h.b16 %v1028
    %v1224 = vunpack.c.l.b16 %v1029
    %v1225 = vunpack.c.h.b16 %v1029
    %v1226 = vunpack.c.l.b16 %v1030
    %v1227 = vunpack.c.h.b16 %v1030
    %v1228 = vunpack.c.l.b16 %v1031
    %v1229 = vunpack.c.h.b16 %v1031
    %v1230 = vunpack.c.l.b16 %v1032
    %v1231 = vunpack.c.h.b16 %v1032
    %v1232 = vunpack.c.l.b16 %v1033
    %v1233 = vunpack.c.h.b16 %v1033
    %v1234 = vunpack.c.l.b16 %v1034
    %v1235 = vunpack.c.h.b16 %v1034
    %v1236 = vunpack.c.l.b16 %v1035
    %v1237 = vunpack.c.h.b16 %v1035
    %v1238 = vunpack.c.l.b16 %v1036
    %v1239 = vunpack.c.h.b16 %v1036
    %v1240 = vunpack.c.l.b16 %v1037
    %v1241 = vunpack.c.h.b16 %v1037
    %v1242 = vunpack.c.l.b16 %v1038
    %v1243 = vunpack.c.h.b16 %v1038
    %v1244 = vunpack.c.l.b16 %v1039
    %v1245 = vunpack.c.h.b16 %v1039
    %v1246 = vunpack.c.l.b16 %v1040
    %v1247 = vunpack.c.h.b16 %v1040
    %v1248 = vunpack.c.l.b16 %v1041
    %v1249 = vunpack.c.h.b16 %v1041
    %v1250 = vunpack.c.l.b16 %v1042
    %v1251 = vunpack.c.h.b16 %v1042
    %v1252 = vunpack.c.l.b16 %v1043
    %v1253 = vunpack.c.h.b16 %v1043
    %v1254 = vunpack.c.l.b16 %v1044
    %v1255 = vunpack.c.h.b16 %v1044
    %v1256 = vunpack.c.l.b16 %v1045
    %v1257 = vunpack.c.h.b16 %v1045
    %v1258 = vunpack.c.l.b16 %v1046
    %v1259 = vunpack.c.h.b16 %v1046
    %v1260 = vunpack.c.l.b16 %v1047
    %v1261 = vunpack.c.h.b16 %v1047
    %v1262 = vunpack.c.l.b16 %v1048
    %v1263 = vunpack.c.h.b16 %v1048
    %v1264 = vunpack.c.l.b16 %v1049
    %v1265 = vunpack.c.h.b16 %v1049
    %v1266 = vunpack.c.l.b16 %v1050
    %v1267 = vunpack.c.h.b16 %v1050
    %v1268 = vunpack.c.l.b16 %v1051
    %v1269 = vunpack.c.h.b16 %v1051
    %v1270 = vunpack.c.l.b16 %v1052
    %v1271 = vunpack.c.h.b16 %v1052
    %v1272 = vunpack.c.l.b16 %v1053
    %v1273 = vunpack.c.h.b16 %v1053
    %v1274 = vunpack.c.l.b16 %v1054
    %v1275 = vunpack.c.h.b16 %v1054
    %v1276 = vunpack.c.l.b16 %v1055
    %v1277 = vunpack.c.h.b16 %v1055
    %v1278 = vunpack.c.l.b16 %v1056
    %v1279 = vunpack.c.h.b16 %v1056
    %v1280 = vunpack.c.l.b16 %v1057
    %v1281 = vunpack.c.h.b16 %v1057
    %v1282 = vunpack.c.l.b16 %v1058
    %v1283 = vunpack.c.h.b16 %v1058
    %v1284 = vunpack.c.l.b16 %v1059
    %v1285 = vunpack.c.h.b16 %v1059
    %v1286 = vunpack.c.l.b16 %v1060
    %v1287 = vunpack.c.h.b16 %v1060
    %v1288 = vunpack.c.l.b16 %v1061
    %v1289 = vunpack.c.h.b16 %v1061
    %v1290 = vunpack.c.l.b16 %v1062
    %v1291 = vunpack.c.h.b16 %v1062
    %v1292 = vunpack.c.l.b16 %v1063
    %v1293 = vunpack.c.h.b16 %v1063
    %v1294 = vunpack.c.l.b16 %v1064
    %v1295 = vunpack.c.h.b16 %v1064
    %v1296 = vunpack.c.l.b16 %v1065
    %v1297 = vunpack.c.h.b16 %v1065
    %v1298 = vunpack.c.l.b16 %v1066
    %v1299 = vunpack.c.h.b16 %v1066
    %v1300 = vunpack.c.l.b16 %v1067
    %v1301 = vunpack.c.h.b16 %v1067
    %v1302 = vpack.c.b16 %v1182, %v1174
    %v1303 = vpack.c.b16 %v1183, %v1175
    %v1304 = vpack.c.b16 %v1184, %v1176
    %v1305 = vpack.c.b16 %v1185, %v1177
    %v1306 = vpack.c.b16 %v1186, %v1178
    %v1307 = vpack.c.b16 %v1187, %v1179
    %v1308 = vpack.c.b16 %v1188, %v1180
    %v1309 = vpack.c.b16 %v1189, %v1181
    %v1310 = vpack.c.b16 %v1198, %v1190
    %v1311 = vpack.c.b16 %v1199, %v1191
    %v1312 = vpack.c.b16 %v1200, %v1192
    %v1313 = vpack.c.b16 %v1201, %v1193
    %v1314 = vpack.c.b16 %v1202, %v1194
    %v1315 = vpack.c.b16 %v1203, %v1195
    %v1316 = vpack.c.b16 %v1204, %v1196
    %v1317 = vpack.c.b16 %v1205, %v1197
    %v1318 = vpack.c.b16 %v1214, %v1206
    %v1319 = vpack.c.b16 %v1215, %v1207
    %v1320 = vpack.c.b16 %v1216, %v1208
    %v1321 = vpack.c.b16 %v1217, %v1209
    %v1322 = vpack.c.b16 %v1218, %v1210
    %v1323 = vpack.c.b16 %v1219, %v1211
    %v1324 = vpack.c.b16 %v1220, %v1212
    %v1325 = vpack.c.b16 %v1221, %v1213
    %v1326 = vpack.c.b16 %v1230, %v1222
    %v1327 = vpack.c.b16 %v1231, %v1223
    %v1328 = vpack.c.b16 %v1232, %v1224
    %v1329 = vpack.c.b16 %v1233, %v1225
    %v1330 = vpack.c.b16 %v1234, %v1226
    %v1331 = vpack.c.b16 %v1235, %v1227
    %v1332 = vpack.c.b16 %v1236, %v1228
    %v1333 = vpack.c.b16 %v1237, %v1229
    %v1334 = vpack.c.b16 %v1246, %v1238
    %v1335 = vpack.c.b16 %v1247, %v1239
    %v1336 = vpack.c.b16 %v1248, %v1240
    %v1337 = vpack.c.b16 %v1249, %v1241
    %v1338 = vpack.c.b16 %v1250, %v1242
    %v1339 = vpack.c.b16 %v1251, %v1243
    %v1340 = vpack.c.b16 %v1252, %v1244
    %v1341 = vpack.c.b16 %v1253, %v1245
    %v1342 = vpack.c.b16 %v1262, %v1254
    %v1343 = vpack.c.b16 %v1263, %v1255
    %v1344 = vpack.c.b16 %v1264, %v1256
    %v1345 = vpack.c.b16 %v1265, %v1257
    %v1346 = vpack.c.b16 %v1266, %v1258
    %v1347 = vpack.c.b16 %v1267, %v1259
    %v1348 = vpack.c.b16 %v1268, %v1260
    %v1349 = vpack.c.b16 %v1269, %v1261
    %v1350 = vpack.c.b16 %v1278, %v1270
    %v1351 = vpack.c.b16 %v1279, %v1271
    %v1352 = vpack.c.b16 %v1280, %v1272
    %v1353 = vpack.c.b16 %v1281, %v1273
    %v1354 = vpack.c.b16 %v1282, %v1274
    %v1355 = vpack.c.b16 %v1283, %v1275
    %v1356 = vpack.c.b16 %v1284, %v1276
    %v1357 = vpack.c.b16 %v1285, %v1277
    %v1358 = vpack.c.b16 %v1294, %v1286
    %v1359 = vpack.c.b16 %v1295, %v1287
    %v1360 = vpack.c.b16 %v1296, %v1288
    %v1361 = vpack.c.b16 %v1297, %v1289
    %v1362 = vpack.c.b16 %v1298, %v1290
    %v1363 = vpack.c.b16 %v1299, %v1291
    %v1364 = vpack.c.b16 %v1300, %v1292
    %v1365 = vpack.c.b16 %v1301, %v1293
    %1430 = vmatprep.subr.bf16.mxu0 %v1303
    %1431 = vmatpush1.bf16.msra.mxu0 %v1302
    %1432 = vmatprep.subr.bf16.mxu0 %v1311
    %1433 = vmatpush1.bf16.msra.mxu0 %v1310
    %1434 = vmatprep.subr.bf16.mxu0 %v1319
    %1435 = vmatpush1.bf16.msra.mxu0 %v1318
    %1436 = vmatprep.subr.bf16.mxu0 %v1327
    %1437 = vmatpush1.bf16.msra.mxu0 %v1326
    %1438 = vmatprep.subr.bf16.mxu0 %v1335
    %1439 = vmatpush1.bf16.msra.mxu0 %v1334
    %1440 = vmatprep.subr.bf16.mxu0 %v1343
    %1441 = vmatpush1.bf16.msra.mxu0 %v1342
    %1442 = vmatprep.subr.bf16.mxu0 %v1351
    %1443 = vmatpush1.bf16.msra.mxu0 %v1350
    %1444 = vmatprep.subr.bf16.mxu0 %v1359
    %1445 = vmatpush1.bf16.msra.mxu0 %v1358
    %1446 = vmatprep.subr.bf16.mxu0 0
    %1447 = vmatpush1.bf16.msra.mxu0 0
    %1448 = vmatprep.subr.bf16.mxu0 0
    %1449 = vmatpush1.bf16.msra.mxu0 0
    %1450 = vmatprep.subr.bf16.mxu0 0
    %1451 = vmatpush1.bf16.msra.mxu0 0
    %1452 = vmatprep.subr.bf16.mxu0 0
    %1453 = vmatpush1.bf16.msra.mxu0 0
    %1454 = vmatprep.subr.bf16.mxu0 0
    %1455 = vmatpush1.bf16.msra.mxu0 0
    %1456 = vmatprep.subr.bf16.mxu0 0
    %1457 = vmatpush1.bf16.msra.mxu0 0
    %1458 = vmatprep.subr.bf16.mxu0 0
    %1459 = vmatpush1.bf16.msra.mxu0 0
    %1460 = vmatprep.subr.bf16.mxu0 0
    %1461 = vmatpush1.bf16.msra.mxu0 0
    %1462 = vmatprep.mubr.bf16.mxu0 0
    %1463 = vmatmul.mubr.bf16.gmra.mrb[0].mxu0 %v1003
    %v1464 = vpop.f32.mrb[0].mxu0
    %v1465 = vadd.f32 %v1073, %v1464
    %v1466 = vpop.f32.mrb[0].mxu0
    %v1467 = vadd.f32 %v1077, %v1466
    %v1468 = vpop.f32.mrb[0].mxu0
    %v1469 = vpop.f32.mrb[0].mxu0
    %1470 = vdwg.mxu0
    %1471 = vmatprep.subr.bf16.mxu0 %v1305
    %1472 = vmatpush1.bf16.msra.mxu0 %v1304
    %1473 = vmatprep.subr.bf16.mxu0 %v1313
    %1474 = vmatpush1.bf16.msra.mxu0 %v1312
    %1475 = vmatprep.subr.bf16.mxu0 %v1321
    %1476 = vmatpush1.bf16.msra.mxu0 %v1320
    %1477 = vmatprep.subr.bf16.mxu0 %v1329
    %1478 = vmatpush1.bf16.msra.mxu0 %v1328
    %1479 = vmatprep.subr.bf16.mxu0 %v1337
    %1480 = vmatpush1.bf16.msra.mxu0 %v1336
    %1481 = vmatprep.subr.bf16.mxu0 %v1345
    %1482 = vmatpush1.bf16.msra.mxu0 %v1344
    %1483 = vmatprep.subr.bf16.mxu0 %v1353
    %1484 = vmatpush1.bf16.msra.mxu0 %v1352
    %1485 = vmatprep.subr.bf16.mxu0 %v1361
    %1486 = vmatpush1.bf16.msra.mxu0 %v1360
    %1487 = vmatprep.subr.bf16.mxu0 0
    %1488 = vmatpush1.bf16.msra.mxu0 0
    %1489 = vmatprep.subr.bf16.mxu0 0
    %1490 = vmatpush1.bf16.msra.mxu0 0
    %1491 = vmatprep.subr.bf16.mxu0 0
    %1492 = vmatpush1.bf16.msra.mxu0 0
    %1493 = vmatprep.subr.bf16.mxu0 0
    %1494 = vmatpush1.bf16.msra.mxu0 0
    %1495 = vmatprep.subr.bf16.mxu0 0
    %1496 = vmatpush1.bf16.msra.mxu0 0
    %1497 = vmatprep.subr.bf16.mxu0 0
    %1498 = vmatpush1.bf16.msra.mxu0 0
    %1499 = vmatprep.subr.bf16.mxu0 0
    %1500 = vmatpush1.bf16.msra.mxu0 0
    %1501 = vmatprep.subr.bf16.mxu0 0
    %1502 = vmatpush1.bf16.msra.mxu0 0
    %1503 = vmatprep.mubr.bf16.mxu0 0
    %1504 = vmatmul.mubr.bf16.gmra.mrb[0].mxu0 %v1003
    %v1505 = vpop.f32.mrb[0].mxu0
    %v1506 = vadd.f32 %v1081, %v1505
    %v1507 = vpop.f32.mrb[0].mxu0
    %v1508 = vadd.f32 %v1085, %v1507
    %v1509 = vpop.f32.mrb[0].mxu0
    %v1510 = vpop.f32.mrb[0].mxu0
    %1511 = vdwg.mxu0
    %1512 = vmatprep.subr.bf16.mxu0 %v1307
    %1513 = vmatpush1.bf16.msra.mxu0 %v1306
    %1514 = vmatprep.subr.bf16.mxu0 %v1315
    %1515 = vmatpush1.bf16.msra.mxu0 %v1314
    %1516 = vmatprep.subr.bf16.mxu0 %v1323
    %1517 = vmatpush1.bf16.msra.mxu0 %v1322
    %1518 = vmatprep.subr.bf16.mxu0 %v1331
    %1519 = vmatpush1.bf16.msra.mxu0 %v1330
    %1520 = vmatprep.subr.bf16.mxu0 %v1339
    %1521 = vmatpush1.bf16.msra.mxu0 %v1338
    %1522 = vmatprep.subr.bf16.mxu0 %v1347
    %1523 = vmatpush1.bf16.msra.mxu0 %v1346
    %1524 = vmatprep.subr.bf16.mxu0 %v1355
    %1525 = vmatpush1.bf16.msra.mxu0 %v1354
    %1526 = vmatprep.subr.bf16.mxu0 %v1363
    %1527 = vmatpush1.bf16.msra.mxu0 %v1362
    %1528 = vmatprep.subr.bf16.mxu0 0
    %1529 = vmatpush1.bf16.msra.mxu0 0
    %1530 = vmatprep.subr.bf16.mxu0 0
    %1531 = vmatpush1.bf16.msra.mxu0 0
    %1532 = vmatprep.subr.bf16.mxu0 0
    %1533 = vmatpush1.bf16.msra.mxu0 0
    %1534 = vmatprep.subr.bf16.mxu0 0
    %1535 = vmatpush1.bf16.msra.mxu0 0
    %1536 = vmatprep.subr.bf16.mxu0 0
    %1537 = vmatpush1.bf16.msra.mxu0 0
    %1538 = vmatprep.subr.bf16.mxu0 0
    %1539 = vmatpush1.bf16.msra.mxu0 0
    %1540 = vmatprep.subr.bf16.mxu0 0
    %1541 = vmatpush1.bf16.msra.mxu0 0
    %1542 = vmatprep.subr.bf16.mxu0 0
    %1543 = vmatpush1.bf16.msra.mxu0 0
    %1544 = vmatprep.mubr.bf16.mxu0 0
    %1545 = vmatmul.mubr.bf16.gmra.mrb[0].mxu0 %v1003
    %v1546 = vpop.f32.mrb[0].mxu0
    %v1547 = vadd.f32 %v1089, %v1546
    %v1548 = vpop.f32.mrb[0].mxu0
    %v1549 = vadd.f32 %v1093, %v1548
    %v1550 = vpop.f32.mrb[0].mxu0
    %v1551 = vpop.f32.mrb[0].mxu0
    %1552 = vdwg.mxu0
    %1553 = vmatprep.subr.bf16.mxu0 %v1309
    %1554 = vmatpush1.bf16.msra.mxu0 %v1308
    %1555 = vmatprep.subr.bf16.mxu0 %v1317
    %1556 = vmatpush1.bf16.msra.mxu0 %v1316
    %1557 = vmatprep.subr.bf16.mxu0 %v1325
    %1558 = vmatpush1.bf16.msra.mxu0 %v1324
    %1559 = vmatprep.subr.bf16.mxu0 %v1333
    %1560 = vmatpush1.bf16.msra.mxu0 %v1332
    %1561 = vmatprep.subr.bf16.mxu0 %v1341
    %1562 = vmatpush1.bf16.msra.mxu0 %v1340
    %1563 = vmatprep.subr.bf16.mxu0 %v1349
    %1564 = vmatpush1.bf16.msra.mxu0 %v1348
    %1565 = vmatprep.subr.bf16.mxu0 %v1357
    %1566 = vmatpush1.bf16.msra.mxu0 %v1356
    %1567 = vmatprep.subr.bf16.mxu0 %v1365
    %1568 = vmatpush1.bf16.msra.mxu0 %v1364
    %1569 = vmatprep.subr.bf16.mxu0 0
    %1570 = vmatpush1.bf16.msra.mxu0 0
    %1571 = vmatprep.subr.bf16.mxu0 0
    %1572 = vmatpush1.bf16.msra.mxu0 0
    %1573 = vmatprep.subr.bf16.mxu0 0
    %1574 = vmatpush1.bf16.msra.mxu0 0
    %1575 = vmatprep.subr.bf16.mxu0 0
    %1576 = vmatpush1.bf16.msra.mxu0 0
    %1577 = vmatprep.subr.bf16.mxu0 0
    %1578 = vmatpush1.bf16.msra.mxu0 0
    %1579 = vmatprep.subr.bf16.mxu0 0
    %1580 = vmatpush1.bf16.msra.mxu0 0
    %1581 = vmatprep.subr.bf16.mxu0 0
    %1582 = vmatpush1.bf16.msra.mxu0 0
    %1583 = vmatprep.subr.bf16.mxu0 0
    %1584 = vmatpush1.bf16.msra.mxu0 0
    %1585 = vmatprep.mubr.bf16.mxu0 0
    %1586 = vmatmul.mubr.bf16.gmra.mrb[0].mxu0 %v1003
    %v1587 = vpop.f32.mrb[0].mxu0
    %v1588 = vadd.f32 %v1097, %v1587
    %v1589 = vpop.f32.mrb[0].mxu0
    %v1590 = vadd.f32 %v1101, %v1589
    %v1591 = vpop.f32.mrb[0].mxu0
    %v1592 = vpop.f32.mrb[0].mxu0
    %1593 = vdwg.mxu0
    %v1594 = vxor.u32 %v1465, 2147483648
    %v1595 = vxor.u32 %v1467, 2147483648
    %v1596 = vxor.u32 %v1506, 2147483648
    %v1597 = vxor.u32 %v1508, 2147483648
    %v1598 = vxor.u32 %v1547, 2147483648
    %v1599 = vxor.u32 %v1549, 2147483648
    %v1600 = vxor.u32 %v1588, 2147483648
    %v1601 = vxor.u32 %v1590, 2147483648
    %v1602 = vmul.f32 %v1594, 1.442695
    %v1603 = vpow.pop %v1602
    %v1604 = vmul.f32 %v1595, 1.442695
    %v1605 = vpow.pop %v1604
    %v1606 = vmul.f32 %v1596, 1.442695
    %v1607 = vpow.pop %v1606
    %v1608 = vmul.f32 %v1597, 1.442695
    %v1609 = vpow.pop %v1608
    %v1610 = vmul.f32 %v1598, 1.442695
    %v1611 = vpow.pop %v1610
    %v1612 = vmul.f32 %v1599, 1.442695
    %v1613 = vpow.pop %v1612
    %v1614 = vmul.f32 %v1600, 1.442695
    %v1615 = vpow.pop %v1614
    %v1616 = vmul.f32 %v1601, 1.442695
    %v1617 = vpow.pop %v1616
    %v1618 = vadd.f32 %v1603, 1.0
    %v1619 = vadd.f32 %v1605, 1.0
    %v1620 = vadd.f32 %v1607, 1.0
    %v1621 = vadd.f32 %v1609, 1.0
    %v1622 = vadd.f32 %v1611, 1.0
    %v1623 = vadd.f32 %v1613, 1.0
    %v1624 = vadd.f32 %v1615, 1.0
    %v1625 = vadd.f32 %v1617, 1.0
    %v1626 = vrcp.pop %v1618
    %v1627 = vmul.f32 1.0, %v1626
    %v1628 = vrcp.pop %v1619
    %v1629 = vmul.f32 1.0, %v1628
    %v1630 = vrcp.pop %v1620
    %v1631 = vmul.f32 1.0, %v1630
    %v1632 = vrcp.pop %v1621
    %v1633 = vmul.f32 1.0, %v1632
    %v1634 = vrcp.pop %v1622
    %v1635 = vmul.f32 1.0, %v1634
    %v1636 = vrcp.pop %v1623
    %v1637 = vmul.f32 1.0, %v1636
    %v1638 = vrcp.pop %v1624
    %v1639 = vmul.f32 1.0, %v1638
    %v1640 = vrcp.pop %v1625
    %v1641 = vmul.f32 1.0, %v1640
    %1642 = vst [vmem:[#allocation13] sm:$0xff] %v1627
    %1643 = vst [vmem:[#allocation13 + $0x8] sm:$0xff] %v1629
    %1644 = vst [vmem:[#allocation13 + $0x10] sm:$0xff] %v1631
    %1645 = vst [vmem:[#allocation13 + $0x18] sm:$0xff] %v1633
    %1646 = vst [vmem:[#allocation13 + $0x20] sm:$0xff] %v1635
    %1647 = vst [vmem:[#allocation13 + $0x28] sm:$0xff] %v1637
    %1648 = vst [vmem:[#allocation13 + $0x30] sm:$0xff] %v1639
    %1649 = vst [vmem:[#allocation13 + $0x38] sm:$0xff] %v1641
    %1650 = vst [vmem:[#allocation14] sm:$0xff] %v919
    // Predicated region
    $region66: #{tpu_custom_call.1} parent=1 // pred_check
      _
    $region67: #{tpu_custom_call.1} parent=1 // pred_check_branch
      %1652 = sbr.rel (0) target = $region69
    $region68: #{tpu_custom_call.1} parent=1 // pred_region
      %s1654 = ssub.s32 1024, 1024
      %1655 = vsyncadd [#allocation4], %s1654
      %s1657 = sshll.u32 [#allocation13], 4
      %s1658 = int_to_ptr.vmem [resolvable:$true] %s1657
      %1660 = dma.vmem_to_hbm [thread:$0]  %s1658, 1024, %s10, [#allocation4]
    $region69: #{tpu_custom_call.1} parent=1 // pred_fallthru
      _
    // Predicated region
    $region70: #{tpu_custom_call.1} parent=1 // pred_check
      _
    $region71: #{tpu_custom_call.1} parent=1 // pred_check_branch
      %1662 = sbr.rel (0) target = $region73
    $region72: #{tpu_custom_call.1} parent=1 // pred_region
      %s1664 = ssub.s32 128, 128
      %1665 = vsyncadd [#allocation15], %s1664
      %s1667 = sshll.u32 [#allocation14], 4
      %s1668 = int_to_ptr.vmem [resolvable:$true] %s1667
      %1670 = dma.vmem_to_hbm [thread:$0]  %s1668, 128, %s11, [#allocation15]
    $region73: #{tpu_custom_call.1} parent=1 // pred_fallthru
      _
    // Predicated region
    $region74: #{tpu_custom_call.1} parent=1 // pred_check
      _
    $region75: #{tpu_custom_call.1} parent=1 // pred_check_branch
      %1672 = sbr.rel (0) target = $region77
    $region76: #{tpu_custom_call.1} parent=1 // pred_region
      %1673 = dma.done [#allocation4], 1024
    $region77: #{tpu_custom_call.1} parent=1 // pred_fallthru
      _
    // Predicated region
    $region78: #{tpu_custom_call.1} parent=1 // pred_check
      _
    $region79: #{tpu_custom_call.1} parent=1 // pred_check_branch
      %1675 = sbr.rel (0) target = $region81
    $region80: #{tpu_custom_call.1} parent=1 // pred_region
      %1676 = dma.done [#allocation15], 128
    $region81: #{tpu_custom_call.1} parent=1 // pred_fallthru
      _
    %1677 = vsyncpa [#allocation3], 1
    %1678 = vsyncpa [#allocation6], 1
    %1679 = vsyncpa [#allocation9], 1
    %1680 = vsyncpa [#allocation12], 1
    %1681 = vsyncpa [#allocation4], 1
    %1682 = vsyncpa [#allocation15], 1

</llo_original>
